<compile_context>
chip_gen: v7x
topology: tpu7x:2x2x1
jax: 0.10.0
libtpu: 0.0.40
codegen_flags: <defaults>
</compile_context>

<pallas_src>
import functools

import jax
import jax.numpy as jnp
from jax import lax
from jax.experimental import pallas as pl
from jax.experimental.pallas import tpu as pltpu


def _round_up(x, m):
    return (x + m - 1) // m * m


# ------------------------------ Pallas kernel --------------------------------
def _make_kernel(t_blk, H, SS):
    """Gate slab columns: [i | f | g | o | s_0..s_{share-1}]  (width 4H+SS).
    Recurrent state rows:  [h | s_0..s_{share-1}]              (width  H+SS).
    Output row layout:     [h | s_0..s_{share-1} | c]          (width 2H+SS)."""

    def kernel(x_ref, m_ref, wxs_ref, wrec_ref, b_ref, out_ref,
               hs_sc, c_sc, xg_sc):
        d = pl.program_id(0)      # 0 = forward, 1 = reverse direction
        tb = pl.program_id(1)     # time block index (sequential, "arbitrary")

        @pl.when(tb == 0)
        def _():                  # init_hid / init_s -> zeros
            hs_sc[...] = jnp.zeros_like(hs_sc)
            c_sc[...] = jnp.zeros_like(c_sc)

        # All x-contributions for the whole time block in one bf16 MXU pass.
        TB, B, D = x_ref.shape
        G = wxs_ref.shape[1]
        xg = jnp.dot(x_ref[...].reshape(TB * B, D), wxs_ref[...],
                     preferred_element_type=jnp.float32)
        xg_sc[...] = (xg + b_ref[...]).reshape(TB, B, G)

        hs0 = hs_sc[...]          # (B, H+SS) = [h | s_0 | ...]
        c0 = c_sc[...]            # (B, H)

        def step(tt, carry):
            hs, c = carry
            # local time index inside the block: fwd -> tt, rev -> T_BLK-1-tt
            tl = d * (t_blk - 1) + (1 - 2 * d) * tt
            g = xg_sc[tl] + jnp.dot(hs, wrec_ref[...],
                                    preferred_element_type=jnp.float32)
            m = m_ref[tl]                                     # (B, 1)

            i_g = jax.nn.sigmoid(g[:, 0 * H:1 * H])
            f_g = jax.nn.sigmoid(g[:, 1 * H:2 * H])
            g_g = jnp.tanh(g[:, 2 * H:3 * H])
            o_g = jax.nn.sigmoid(g[:, 3 * H:4 * H])
            s_new = jnp.tanh(g[:, 4 * H:])                    # (B, SS)

            c_new = f_g * c + i_g * g_g
            h_new = o_g * jnp.tanh(c_new)

            h_prev = hs[:, :H]
            s_prev = hs[:, H:]
            # masked carry: padded steps keep the previous state
            h_cur = h_prev + m * (h_new - h_prev)
            c_cur = c + m * (c_new - c)
            s_cur = s_prev + m * (s_new - s_prev)

            hs_cur = jnp.concatenate([h_cur, s_cur], axis=-1)
            # one lane-dense store per step: [h | s | c]
            out_ref[tl] = jnp.concatenate([hs_cur, c_cur],
                                          axis=-1).astype(out_ref.dtype)
            return (hs_cur, c_cur)

        hs_fin, c_fin = lax.fori_loop(0, t_blk, step, (hs0, c0), unroll=True)
        hs_sc[...] = hs_fin
        c_sc[...] = c_fin

    return kernel


# ------------------------------ param packing --------------------------------
def _pack_params(params, compute_dtype):
    Wx, Wh, b = params["Wx"], params["Wh"], params["b"]
    Wsx, Wss, bs = params["Wsx"], params["Wss"], params["bs"]
    H = Wh.shape[0]
    share, _, S = Wsx.shape
    G = 4 * H + share * S
    R = H + share * S
    # x-projection: [Wx | Wsx_0 | Wsx_1 | ...]           -> (D, G)
    wxs = jnp.concatenate([Wx] + [Wsx[k] for k in range(share)], axis=1)
    # recurrent, block-diagonal over the s states          -> (R, G)
    wrec = jnp.zeros((R, G), jnp.float32)
    wrec = wrec.at[:H, :4 * H].set(Wh)
    for k in range(share):
        wrec = wrec.at[H + k * S:H + (k + 1) * S,
                       4 * H + k * S:4 * H + (k + 1) * S].set(Wss[k])
    bias = jnp.concatenate([b] + [bs[k] for k in range(share)], axis=1)  # (1,G)
    return wxs.astype(compute_dtype), wrec.astype(jnp.float32), bias.astype(jnp.float32)


# --------------------------------- wrapper ------------------------------------
@functools.partial(jax.jit, static_argnames=("t_blk",))
def bislstm_forward(inputs, mask, params, *, t_blk=16):
    """inputs: (B, L, D), mask: (B, L) float 0/1.  `idx` is unused (see TODO)."""
    B, L, D = inputs.shape
    H = params["Wh"].shape[0]
    share, _, S = params["Wsx"].shape
    SS = share * S
    G = 4 * H + SS            # gate slab width
    R = H + SS                # recurrent state width
    C = 2 * H + SS            # output row width [h | s | c]
    f32, bf16 = jnp.float32, jnp.bfloat16

    T_BLK = min(t_blk, L)
    L_pad = _round_up(L, T_BLK)
    NB = L_pad // T_BLK
    B_pad = _round_up(B, 8)   # fill the 8 sublanes

    # time-major, padded (padded rows/steps get mask 0 => state carries through)
    x_tm = jnp.transpose(inputs, (1, 0, 2)).astype(bf16)          # (L, B, D)
    m_tm = jnp.transpose(mask, (1, 0))[:, :, None].astype(f32)    # (L, B, 1)
    x_tm = jnp.pad(x_tm, ((0, L_pad - L), (0, B_pad - B), (0, 0)))
    m_tm = jnp.pad(m_tm, ((0, L_pad - L), (0, B_pad - B), (0, 0)))

    wxs, wrec, bias = _pack_params(params, bf16)

    def t_map(d, tb):         # forward: tb ; reverse: NB-1-tb
        return d * (NB - 1) + (1 - 2 * d) * tb

    grid_spec = pltpu.PrefetchScalarGridSpec(
        num_scalar_prefetch=0,
        grid=(2, NB),
        in_specs=[
            pl.BlockSpec((T_BLK, B_pad, D), lambda d, tb: (t_map(d, tb), 0, 0)),
            pl.BlockSpec((T_BLK, B_pad, 1), lambda d, tb: (t_map(d, tb), 0, 0)),
            pl.BlockSpec((D, G), lambda d, tb: (0, 0)),   # packed x-proj weight
            pl.BlockSpec((R, G), lambda d, tb: (0, 0)),   # block-diag recurrent
            pl.BlockSpec((1, G), lambda d, tb: (0, 0)),   # packed bias
        ],
        out_specs=pl.BlockSpec((None, T_BLK, B_pad, C),
                               lambda d, tb: (d, t_map(d, tb), 0, 0)),
        scratch_shapes=[
            pltpu.VMEM((B_pad, R), f32),            # [h | s] recurrent state
            pltpu.VMEM((B_pad, H), f32),            # c recurrent state
            pltpu.VMEM((T_BLK, B_pad, G), f32),     # per-block x-projections
        ],
    )

    out = pl.pallas_call(
        _make_kernel(T_BLK, H, SS),
        out_shape=jax.ShapeDtypeStruct((2, L_pad, B_pad, C), f32),
        grid_spec=grid_spec,
        compiler_params=pltpu.CompilerParams(
            dimension_semantics=("parallel", "arbitrary"),
            vmem_limit_bytes=32 * 1024 * 1024),
    )(x_tm, m_tm, wxs, wrec, bias)

    out = out[:, :L, :B]                     # (2, L, B, C) strip padding
    h_fr = out[..., :H]                      # (2, L, B, H)
    s_fr = out[..., H:H + SS]                # (2, L, B, SS)
    c_fr = out[..., H + SS:]                 # (2, L, B, H)

    h_out = jnp.concatenate([h_fr[0], h_fr[1]], axis=-1)     # (L, B, 2H)
    c_out = jnp.concatenate([c_fr[0], c_fr[1]], axis=-1)     # (L, B, 2H)
    final_list = [jnp.concatenate([s_fr[0, ..., k * S:(k + 1) * S],
                                   s_fr[1, ..., k * S:(k + 1) * S]], axis=-1)
                  for k in range(share)]                     # each (L, B, 2S)
    return h_out, c_out, final_list


# ----------------------------- pure-JAX reference -----------------------------
def _ref_direction(x_tm, m_tm, params):
    share, _, S = params["Wsx"].shape
    H = params["Wh"].shape[0]
    B = x_tm.shape[1]

    def cell(carry, inp):
        h, c, s = carry
        x, m = inp
        gates = x @ params["Wx"] + h @ params["Wh"] + params["b"]
        i_g = jax.nn.sigmoid(gates[:, 0 * H:1 * H])
        f_g = jax.nn.sigmoid(gates[:, 1 * H:2 * H])
        g_g = jnp.tanh(gates[:, 2 * H:3 * H])
        o_g = jax.nn.sigmoid(gates[:, 3 * H:4 * H])
        c_new = f_g * c + i_g * g_g
        h_new = o_g * jnp.tanh(c_new)
        h_cur = m * h_new + (1.0 - m) * h
        c_cur = m * c_new + (1.0 - m) * c
        s_list = []
        for k in range(share):
            sk = jnp.tanh(x @ params["Wsx"][k] + s[k] @ params["Wss"][k]
                          + params["bs"][k])
            s_list.append(m * sk + (1.0 - m) * s[k])
        s_cur = jnp.stack(s_list)
        return (h_cur, c_cur, s_cur), (h_cur, c_cur, s_cur)

    init = (jnp.zeros((B, H)), jnp.zeros((B, H)), jnp.zeros((share, B, S)))
    _, (hs, cs, ss) = lax.scan(cell, init, (x_tm, m_tm))
    return hs, cs, ss


def bislstm_reference(inputs, mask, params):
    x_tm = jnp.transpose(inputs, (1, 0, 2))
    m_tm = jnp.transpose(mask, (1, 0))[:, :, None]
    h_f, c_f, s_f = _ref_direction(x_tm, m_tm, params)
    h_r, c_r, s_r = _ref_direction(jnp.flip(x_tm, 0), jnp.flip(m_tm, 0), params)
    h_r, c_r, s_r = jnp.flip(h_r, 0), jnp.flip(c_r, 0), jnp.flip(s_r, 0)
    share = s_f.shape[1]
    return (jnp.concatenate([h_f, h_r], 2),
            jnp.concatenate([c_f, c_r], 2),
            [jnp.concatenate([s_f[:, k], s_r[:, k]], -1) for k in range(share)])


# ----------------------------------- driver -----------------------------------
if __name__ == "__main__":
    B, L, D, H, S, SHARE = 2, 8, 16, 32, 32, 2
    key = jax.random.PRNGKey(0)
    ks = jax.random.split(key, 8)

    params = {
        "Wx":  0.1 * jax.random.normal(ks[0], (D, 4 * H), jnp.float32),
        "Wh":  0.1 * jax.random.normal(ks[1], (H, 4 * H), jnp.float32),
        "b":   0.1 * jax.random.normal(ks[2], (1, 4 * H), jnp.float32),
        "Wsx": 0.1 * jax.random.normal(ks[3], (SHARE, D, S), jnp.float32),
        "Wss": 0.1 * jax.random.normal(ks[4], (SHARE, S, S), jnp.float32),
        "bs":  0.1 * jax.random.normal(ks[5], (SHARE, 1, S), jnp.float32),
    }

    x = jax.random.normal(ks[6], (B, L, D), jnp.float32)
    # mask: second sequence has its last 3 timesteps padded
    mask = jnp.ones((B, L), jnp.float32).at[1, L - 3:].set(0.0)

    h_f, c_f, final_list = bislstm_forward(x, mask, params)
    jax.block_until_ready(h_f)
    jax.block_until_ready(c_f)
    for s in final_list:
        jax.block_until_ready(s)

    # sanity check against pure-JAX f32 reference (loose tol: bf16 x-projection)
    h_ref, c_ref, s_ref = bislstm_reference(x, mask, params)
    assert h_f.shape == (L, B, 2 * H) and c_f.shape == (L, B, 2 * H)
    assert len(final_list) == SHARE and final_list[0].shape == (L, B, 2 * S)
    assert jnp.allclose(h_f, h_ref, rtol=5e-2, atol=5e-2)
    assert jnp.allclose(c_f, c_ref, rtol=5e-2, atol=5e-2)
    for a, b in zip(final_list, s_ref):
        assert jnp.allclose(a, b, rtol=5e-2, atol=5e-2)

    print("KERNEL_OK")
</pallas_src>

<mosaic_0001>
module attributes {stable_mosaic.version = 11 : i64} {
  func.func @kernel(%arg0: i32, %arg1: i32, %arg2: memref<8x8x16xbf16, #tpu.memory_space<vmem>>, %arg3: memref<8x8x1xf32, #tpu.memory_space<vmem>>, %arg4: memref<16x192xbf16, #tpu.memory_space<vmem>>, %arg5: memref<96x192xf32, #tpu.memory_space<vmem>>, %arg6: memref<1x192xf32, #tpu.memory_space<vmem>>, %arg7: memref<1x8x8x128xf32, #tpu.memory_space<vmem>>, %arg8: memref<8x96xf32, #tpu.memory_space<vmem>>, %arg9: memref<8x32xf32, #tpu.memory_space<vmem>>, %arg10: memref<8x8x192xf32, #tpu.memory_space<vmem>>) attributes {dimension_semantics = [#tpu.dimension_semantics<parallel>, #tpu.dimension_semantics<arbitrary>], iteration_bounds = array<i64: 2, 1>, scalar_prefetch = 0 : i64, scratch_operands = 3 : i64, tpu.core_type = #tpu.core_type<tc>, window_params = [{transform_indices = @transform_0, window_bounds = array<i64: 8, 8, 16>}, {transform_indices = @transform_1, window_bounds = array<i64: 8, 8, 1>}, {pipeline_mode = #tpu.pipeline_mode<synchronous>, transform_indices = @transform_2, window_bounds = array<i64: 16, 192>}, {pipeline_mode = #tpu.pipeline_mode<synchronous>, transform_indices = @transform_3, window_bounds = array<i64: 96, 192>}, {pipeline_mode = #tpu.pipeline_mode<synchronous>, transform_indices = @transform_4, window_bounds = array<i64: 1, 192>}, {transform_indices = @transform_5, window_bounds = array<i64: 1, 8, 8, 128>}]} {
    %c0_i32 = arith.constant 0 : i32
    %0 = arith.cmpi eq, %arg1, %c0_i32 : i32
    %1 = arith.extui %0 : i1 to i32
    %c0_i32_0 = arith.constant 0 : i32
    %2 = arith.cmpi ne, %1, %c0_i32_0 : i32
    scf.if %2 {
      %cst_147 = arith.constant 0.000000e+00 : f32
      %504 = vector.broadcast %cst_147 : f32 to vector<8x96xf32>
      %c0_148 = arith.constant 0 : index
      %c0_149 = arith.constant 0 : index
      %505 = vector.load %arg8[%c0_148, %c0_149] : memref<8x96xf32, #tpu.memory_space<vmem>>, vector<8x96xf32>
      tpu.vector_store %arg8[%c0_148, %c0_149], %504 {strides = array<i32>} : memref<8x96xf32, #tpu.memory_space<vmem>>, vector<8x96xf32>,
      %cst_150 = arith.constant 0.000000e+00 : f32
      %506 = vector.broadcast %cst_150 : f32 to vector<8x32xf32>
      %c0_151 = arith.constant 0 : index
      %c0_152 = arith.constant 0 : index
      %507 = vector.load %arg9[%c0_151, %c0_152] : memref<8x32xf32, #tpu.memory_space<vmem>>, vector<8x32xf32>
      tpu.vector_store %arg9[%c0_151, %c0_152], %506 {strides = array<i32>} : memref<8x32xf32, #tpu.memory_space<vmem>>, vector<8x32xf32>,
    } else {
    }
    %c0 = arith.constant 0 : index
    %c0_1 = arith.constant 0 : index
    %c0_2 = arith.constant 0 : index
    %3 = vector.load %arg2[%c0, %c0_1, %c0_2] : memref<8x8x16xbf16, #tpu.memory_space<vmem>>, vector<8x8x16xbf16>
    %4 = vector.shape_cast %3 : vector<8x8x16xbf16> to vector<64x16xbf16>
    %c0_3 = arith.constant 0 : index
    %c0_4 = arith.constant 0 : index
    %5 = vector.load %arg4[%c0_3, %c0_4] : memref<16x192xbf16, #tpu.memory_space<vmem>>, vector<16x192xbf16>
    %cst = arith.constant dense<0.000000e+00> : vector<64x192xf32>
    %6 = tpu.matmul %4, %5, %cst {dimension_numbers = #tpu.dot_dimension_numbers<[1], [0], [0], [1], [0, 0, 1, 1], [], []>} : vector<64x16xbf16>, vector<16x192xbf16>, vector<64x192xf32> -> vector<64x192xf32>
    %c0_5 = arith.constant 0 : index
    %c0_6 = arith.constant 0 : index
    %7 = vector.load %arg6[%c0_5, %c0_6] : memref<1x192xf32, #tpu.memory_space<vmem>>, vector<1x192xf32>
    %8 = vector.broadcast %7 : vector<1x192xf32> to vector<64x192xf32>
    %9 = arith.addf %6, %8 : vector<64x192xf32>
    %10 = vector.shape_cast %9 : vector<64x192xf32> to vector<8x8x192xf32>
    %c0_7 = arith.constant 0 : index
    %c0_8 = arith.constant 0 : index
    %c0_9 = arith.constant 0 : index
    %11 = vector.load %arg10[%c0_7, %c0_8, %c0_9] : memref<8x8x192xf32, #tpu.memory_space<vmem>>, vector<8x8x192xf32>
    tpu.vector_store %arg10[%c0_7, %c0_8, %c0_9], %10 {strides = array<i32>} : memref<8x8x192xf32, #tpu.memory_space<vmem>>, vector<8x8x192xf32>,
    %c0_10 = arith.constant 0 : index
    %c0_11 = arith.constant 0 : index
    %12 = vector.load %arg8[%c0_10, %c0_11] : memref<8x96xf32, #tpu.memory_space<vmem>>, vector<8x96xf32>
    %c0_12 = arith.constant 0 : index
    %c0_13 = arith.constant 0 : index
    %13 = vector.load %arg9[%c0_12, %c0_13] : memref<8x32xf32, #tpu.memory_space<vmem>>, vector<8x32xf32>
    %c0_i32_14 = arith.constant 0 : i32
    %c7_i32 = arith.constant 7 : i32
    %14 = arith.muli %arg0, %c7_i32 : i32
    %c2_i32 = arith.constant 2 : i32
    %15 = arith.muli %c2_i32, %arg0 : i32
    %c1_i32 = arith.constant 1 : i32
    %16 = arith.subi %c1_i32, %15 : i32
    %17 = arith.muli %16, %c0_i32_14 : i32
    %18 = arith.addi %14, %17 : i32
    %19 = arith.index_cast %18 : i32 to index
    %c0_15 = arith.constant 0 : index
    %c0_16 = arith.constant 0 : index
    %20 = vector.load %arg10[%19, %c0_15, %c0_16] : memref<8x8x192xf32, #tpu.memory_space<vmem>>, vector<1x8x192xf32>
    %21 = vector.shape_cast %20 : vector<1x8x192xf32> to vector<8x192xf32>
    %c0_17 = arith.constant 0 : index
    %c0_18 = arith.constant 0 : index
    %22 = vector.load %arg5[%c0_17, %c0_18] : memref<96x192xf32, #tpu.memory_space<vmem>>, vector<96x192xf32>
    %cst_19 = arith.constant dense<0.000000e+00> : vector<8x192xf32>
    %23 = tpu.matmul %12, %22, %cst_19 {dimension_numbers = #tpu.dot_dimension_numbers<[1], [0], [0], [1], [0, 0, 1, 1], [], []>} : vector<8x96xf32>, vector<96x192xf32>, vector<8x192xf32> -> vector<8x192xf32>
    %24 = arith.addf %21, %23 : vector<8x192xf32>
    %25 = arith.index_cast %18 : i32 to index
    %c0_20 = arith.constant 0 : index
    %c0_21 = arith.constant 0 : index
    %26 = vector.load %arg3[%25, %c0_20, %c0_21] : memref<8x8x1xf32, #tpu.memory_space<vmem>>, vector<1x8x1xf32>
    %27 = vector.shape_cast %26 : vector<1x8x1xf32> to vector<8x1xf32>
    %28 = vector.extract_strided_slice %24 {offsets = [0, 0], sizes = [8, 32], strides = [1, 1]} : vector<8x192xf32> to vector<8x32xf32>
    %29 = arith.negf %28 : vector<8x32xf32>
    %30 = math.exp %29 : vector<8x32xf32>
    %cst_22 = arith.constant 1.000000e+00 : f32
    %31 = vector.broadcast %cst_22 : f32 to vector<8x32xf32>
    %32 = arith.addf %31, %30 : vector<8x32xf32>
    %33 = arith.divf %31, %32 : vector<8x32xf32>
    %34 = vector.extract_strided_slice %24 {offsets = [0, 32], sizes = [8, 32], strides = [1, 1]} : vector<8x192xf32> to vector<8x32xf32>
    %35 = arith.negf %34 : vector<8x32xf32>
    %36 = math.exp %35 : vector<8x32xf32>
    %cst_23 = arith.constant 1.000000e+00 : f32
    %37 = vector.broadcast %cst_23 : f32 to vector<8x32xf32>
    %38 = arith.addf %37, %36 : vector<8x32xf32>
    %39 = arith.divf %37, %38 : vector<8x32xf32>
    %40 = vector.extract_strided_slice %24 {offsets = [0, 64], sizes = [8, 32], strides = [1, 1]} : vector<8x192xf32> to vector<8x32xf32>
    %41 = math.tanh %40 : vector<8x32xf32>
    %42 = vector.extract_strided_slice %24 {offsets = [0, 96], sizes = [8, 32], strides = [1, 1]} : vector<8x192xf32> to vector<8x32xf32>
    %43 = arith.negf %42 : vector<8x32xf32>
    %44 = math.exp %43 : vector<8x32xf32>
    %cst_24 = arith.constant 1.000000e+00 : f32
    %45 = vector.broadcast %cst_24 : f32 to vector<8x32xf32>
    %46 = arith.addf %45, %44 : vector<8x32xf32>
    %47 = arith.divf %45, %46 : vector<8x32xf32>
    %48 = vector.extract_strided_slice %24 {offsets = [0, 128], sizes = [8, 64], strides = [1, 1]} : vector<8x192xf32> to vector<8x64xf32>
    %49 = math.tanh %48 : vector<8x64xf32>
    %50 = arith.mulf %39, %13 : vector<8x32xf32>
    %51 = arith.mulf %33, %41 : vector<8x32xf32>
    %52 = arith.addf %50, %51 : vector<8x32xf32>
    %53 = math.tanh %52 : vector<8x32xf32>
    %54 = arith.mulf %47, %53 : vector<8x32xf32>
    %55 = vector.extract_strided_slice %12 {offsets = [0, 0], sizes = [8, 32], strides = [1, 1]} : vector<8x96xf32> to vector<8x32xf32>
    %56 = vector.extract_strided_slice %12 {offsets = [0, 32], sizes = [8, 64], strides = [1, 1]} : vector<8x96xf32> to vector<8x64xf32>
    %57 = arith.subf %54, %55 : vector<8x32xf32>
    %58 = vector.broadcast %27 : vector<8x1xf32> to vector<8x32xf32>
    %59 = arith.mulf %58, %57 : vector<8x32xf32>
    %60 = arith.addf %55, %59 : vector<8x32xf32>
    %61 = arith.subf %52, %13 : vector<8x32xf32>
    %62 = vector.broadcast %27 : vector<8x1xf32> to vector<8x32xf32>
    %63 = arith.mulf %62, %61 : vector<8x32xf32>
    %64 = arith.addf %13, %63 : vector<8x32xf32>
    %65 = arith.subf %49, %56 : vector<8x64xf32>
    %66 = vector.broadcast %27 : vector<8x1xf32> to vector<8x64xf32>
    %67 = arith.mulf %66, %65 : vector<8x64xf32>
    %68 = arith.addf %56, %67 : vector<8x64xf32>
    %69 = tpu.concatenate %60, %68 in 1 : vector<8x32xf32>, vector<8x64xf32> -> vector<8x96xf32>
    %70 = tpu.concatenate %69, %64 in 1 : vector<8x96xf32>, vector<8x32xf32> -> vector<8x128xf32>
    %c0_25 = arith.constant 0 : index
    %71 = arith.index_cast %18 : i32 to index
    %c0_26 = arith.constant 0 : index
    %c0_27 = arith.constant 0 : index
    %72 = vector.load %arg7[%c0_25, %71, %c0_26, %c0_27] : memref<1x8x8x128xf32, #tpu.memory_space<vmem>>, vector<1x1x8x128xf32>
    %73 = vector.shape_cast %72 : vector<1x1x8x128xf32> to vector<8x128xf32>
    %74 = vector.shape_cast %70 : vector<8x128xf32> to vector<1x1x8x128xf32>
    tpu.vector_store %arg7[%c0_25, %71, %c0_26, %c0_27], %74 {strides = array<i32>} : memref<1x8x8x128xf32, #tpu.memory_space<vmem>>, vector<1x1x8x128xf32>,
    %c1_i32_28 = arith.constant 1 : i32
    %c7_i32_29 = arith.constant 7 : i32
    %75 = arith.muli %arg0, %c7_i32_29 : i32
    %c2_i32_30 = arith.constant 2 : i32
    %76 = arith.muli %c2_i32_30, %arg0 : i32
    %c1_i32_31 = arith.constant 1 : i32
    %77 = arith.subi %c1_i32_31, %76 : i32
    %78 = arith.muli %77, %c1_i32_28 : i32
    %79 = arith.addi %75, %78 : i32
    %80 = arith.index_cast %79 : i32 to index
    %c0_32 = arith.constant 0 : index
    %c0_33 = arith.constant 0 : index
    %81 = vector.load %arg10[%80, %c0_32, %c0_33] : memref<8x8x192xf32, #tpu.memory_space<vmem>>, vector<1x8x192xf32>
    %82 = vector.shape_cast %81 : vector<1x8x192xf32> to vector<8x192xf32>
    %c0_34 = arith.constant 0 : index
    %c0_35 = arith.constant 0 : index
    %83 = vector.load %arg5[%c0_34, %c0_35] : memref<96x192xf32, #tpu.memory_space<vmem>>, vector<96x192xf32>
    %cst_36 = arith.constant dense<0.000000e+00> : vector<8x192xf32>
    %84 = tpu.matmul %69, %83, %cst_36 {dimension_numbers = #tpu.dot_dimension_numbers<[1], [0], [0], [1], [0, 0, 1, 1], [], []>} : vector<8x96xf32>, vector<96x192xf32>, vector<8x192xf32> -> vector<8x192xf32>
    %85 = arith.addf %82, %84 : vector<8x192xf32>
    %86 = arith.index_cast %79 : i32 to index
    %c0_37 = arith.constant 0 : index
    %c0_38 = arith.constant 0 : index
    %87 = vector.load %arg3[%86, %c0_37, %c0_38] : memref<8x8x1xf32, #tpu.memory_space<vmem>>, vector<1x8x1xf32>
    %88 = vector.shape_cast %87 : vector<1x8x1xf32> to vector<8x1xf32>
    %89 = vector.extract_strided_slice %85 {offsets = [0, 0], sizes = [8, 32], strides = [1, 1]} : vector<8x192xf32> to vector<8x32xf32>
    %90 = arith.negf %89 : vector<8x32xf32>
    %91 = math.exp %90 : vector<8x32xf32>
    %cst_39 = arith.constant 1.000000e+00 : f32
    %92 = vector.broadcast %cst_39 : f32 to vector<8x32xf32>
    %93 = arith.addf %92, %91 : vector<8x32xf32>
    %94 = arith.divf %92, %93 : vector<8x32xf32>
    %95 = vector.extract_strided_slice %85 {offsets = [0, 32], sizes = [8, 32], strides = [1, 1]} : vector<8x192xf32> to vector<8x32xf32>
    %96 = arith.negf %95 : vector<8x32xf32>
    %97 = math.exp %96 : vector<8x32xf32>
    %cst_40 = arith.constant 1.000000e+00 : f32
    %98 = vector.broadcast %cst_40 : f32 to vector<8x32xf32>
    %99 = arith.addf %98, %97 : vector<8x32xf32>
    %100 = arith.divf %98, %99 : vector<8x32xf32>
    %101 = vector.extract_strided_slice %85 {offsets = [0, 64], sizes = [8, 32], strides = [1, 1]} : vector<8x192xf32> to vector<8x32xf32>
    %102 = math.tanh %101 : vector<8x32xf32>
    %103 = vector.extract_strided_slice %85 {offsets = [0, 96], sizes = [8, 32], strides = [1, 1]} : vector<8x192xf32> to vector<8x32xf32>
    %104 = arith.negf %103 : vector<8x32xf32>
    %105 = math.exp %104 : vector<8x32xf32>
    %cst_41 = arith.constant 1.000000e+00 : f32
    %106 = vector.broadcast %cst_41 : f32 to vector<8x32xf32>
    %107 = arith.addf %106, %105 : vector<8x32xf32>
    %108 = arith.divf %106, %107 : vector<8x32xf32>
    %109 = vector.extract_strided_slice %85 {offsets = [0, 128], sizes = [8, 64], strides = [1, 1]} : vector<8x192xf32> to vector<8x64xf32>
    %110 = math.tanh %109 : vector<8x64xf32>
    %111 = arith.mulf %100, %64 : vector<8x32xf32>
    %112 = arith.mulf %94, %102 : vector<8x32xf32>
    %113 = arith.addf %111, %112 : vector<8x32xf32>
    %114 = math.tanh %113 : vector<8x32xf32>
    %115 = arith.mulf %108, %114 : vector<8x32xf32>
    %116 = vector.extract_strided_slice %69 {offsets = [0, 0], sizes = [8, 32], strides = [1, 1]} : vector<8x96xf32> to vector<8x32xf32>
    %117 = vector.extract_strided_slice %69 {offsets = [0, 32], sizes = [8, 64], strides = [1, 1]} : vector<8x96xf32> to vector<8x64xf32>
    %118 = arith.subf %115, %116 : vector<8x32xf32>
    %119 = vector.broadcast %88 : vector<8x1xf32> to vector<8x32xf32>
    %120 = arith.mulf %119, %118 : vector<8x32xf32>
    %121 = arith.addf %116, %120 : vector<8x32xf32>
    %122 = arith.subf %113, %64 : vector<8x32xf32>
    %123 = vector.broadcast %88 : vector<8x1xf32> to vector<8x32xf32>
    %124 = arith.mulf %123, %122 : vector<8x32xf32>
    %125 = arith.addf %64, %124 : vector<8x32xf32>
    %126 = arith.subf %110, %117 : vector<8x64xf32>
    %127 = vector.broadcast %88 : vector<8x1xf32> to vector<8x64xf32>
    %128 = arith.mulf %127, %126 : vector<8x64xf32>
    %129 = arith.addf %117, %128 : vector<8x64xf32>
    %130 = tpu.concatenate %121, %129 in 1 : vector<8x32xf32>, vector<8x64xf32> -> vector<8x96xf32>
    %131 = tpu.concatenate %130, %125 in 1 : vector<8x96xf32>, vector<8x32xf32> -> vector<8x128xf32>
    %c0_42 = arith.constant 0 : index
    %132 = arith.index_cast %79 : i32 to index
    %c0_43 = arith.constant 0 : index
    %c0_44 = arith.constant 0 : index
    %133 = vector.load %arg7[%c0_42, %132, %c0_43, %c0_44] : memref<1x8x8x128xf32, #tpu.memory_space<vmem>>, vector<1x1x8x128xf32>
    %134 = vector.shape_cast %133 : vector<1x1x8x128xf32> to vector<8x128xf32>
    %135 = vector.shape_cast %131 : vector<8x128xf32> to vector<1x1x8x128xf32>
    tpu.vector_store %arg7[%c0_42, %132, %c0_43, %c0_44], %135 {strides = array<i32>} : memref<1x8x8x128xf32, #tpu.memory_space<vmem>>, vector<1x1x8x128xf32>,
    %c2_i32_45 = arith.constant 2 : i32
    %c7_i32_46 = arith.constant 7 : i32
    %136 = arith.muli %arg0, %c7_i32_46 : i32
    %c2_i32_47 = arith.constant 2 : i32
    %137 = arith.muli %c2_i32_47, %arg0 : i32
    %c1_i32_48 = arith.constant 1 : i32
    %138 = arith.subi %c1_i32_48, %137 : i32
    %139 = arith.muli %138, %c2_i32_45 : i32
    %140 = arith.addi %136, %139 : i32
    %141 = arith.index_cast %140 : i32 to index
    %c0_49 = arith.constant 0 : index
    %c0_50 = arith.constant 0 : index
    %142 = vector.load %arg10[%141, %c0_49, %c0_50] : memref<8x8x192xf32, #tpu.memory_space<vmem>>, vector<1x8x192xf32>
    %143 = vector.shape_cast %142 : vector<1x8x192xf32> to vector<8x192xf32>
    %c0_51 = arith.constant 0 : index
    %c0_52 = arith.constant 0 : index
    %144 = vector.load %arg5[%c0_51, %c0_52] : memref<96x192xf32, #tpu.memory_space<vmem>>, vector<96x192xf32>
    %cst_53 = arith.constant dense<0.000000e+00> : vector<8x192xf32>
    %145 = tpu.matmul %130, %144, %cst_53 {dimension_numbers = #tpu.dot_dimension_numbers<[1], [0], [0], [1], [0, 0, 1, 1], [], []>} : vector<8x96xf32>, vector<96x192xf32>, vector<8x192xf32> -> vector<8x192xf32>
    %146 = arith.addf %143, %145 : vector<8x192xf32>
    %147 = arith.index_cast %140 : i32 to index
    %c0_54 = arith.constant 0 : index
    %c0_55 = arith.constant 0 : index
    %148 = vector.load %arg3[%147, %c0_54, %c0_55] : memref<8x8x1xf32, #tpu.memory_space<vmem>>, vector<1x8x1xf32>
    %149 = vector.shape_cast %148 : vector<1x8x1xf32> to vector<8x1xf32>
    %150 = vector.extract_strided_slice %146 {offsets = [0, 0], sizes = [8, 32], strides = [1, 1]} : vector<8x192xf32> to vector<8x32xf32>
    %151 = arith.negf %150 : vector<8x32xf32>
    %152 = math.exp %151 : vector<8x32xf32>
    %cst_56 = arith.constant 1.000000e+00 : f32
    %153 = vector.broadcast %cst_56 : f32 to vector<8x32xf32>
    %154 = arith.addf %153, %152 : vector<8x32xf32>
    %155 = arith.divf %153, %154 : vector<8x32xf32>
    %156 = vector.extract_strided_slice %146 {offsets = [0, 32], sizes = [8, 32], strides = [1, 1]} : vector<8x192xf32> to vector<8x32xf32>
    %157 = arith.negf %156 : vector<8x32xf32>
    %158 = math.exp %157 : vector<8x32xf32>
    %cst_57 = arith.constant 1.000000e+00 : f32
    %159 = vector.broadcast %cst_57 : f32 to vector<8x32xf32>
    %160 = arith.addf %159, %158 : vector<8x32xf32>
    %161 = arith.divf %159, %160 : vector<8x32xf32>
    %162 = vector.extract_strided_slice %146 {offsets = [0, 64], sizes = [8, 32], strides = [1, 1]} : vector<8x192xf32> to vector<8x32xf32>
    %163 = math.tanh %162 : vector<8x32xf32>
    %164 = vector.extract_strided_slice %146 {offsets = [0, 96], sizes = [8, 32], strides = [1, 1]} : vector<8x192xf32> to vector<8x32xf32>
    %165 = arith.negf %164 : vector<8x32xf32>
    %166 = math.exp %165 : vector<8x32xf32>
    %cst_58 = arith.constant 1.000000e+00 : f32
    %167 = vector.broadcast %cst_58 : f32 to vector<8x32xf32>
    %168 = arith.addf %167, %166 : vector<8x32xf32>
    %169 = arith.divf %167, %168 : vector<8x32xf32>
    %170 = vector.extract_strided_slice %146 {offsets = [0, 128], sizes = [8, 64], strides = [1, 1]} : vector<8x192xf32> to vector<8x64xf32>
    %171 = math.tanh %170 : vector<8x64xf32>
    %172 = arith.mulf %161, %125 : vector<8x32xf32>
    %173 = arith.mulf %155, %163 : vector<8x32xf32>
    %174 = arith.addf %172, %173 : vector<8x32xf32>
    %175 = math.tanh %174 : vector<8x32xf32>
    %176 = arith.mulf %169, %175 : vector<8x32xf32>
    %177 = vector.extract_strided_slice %130 {offsets = [0, 0], sizes = [8, 32], strides = [1, 1]} : vector<8x96xf32> to vector<8x32xf32>
    %178 = vector.extract_strided_slice %130 {offsets = [0, 32], sizes = [8, 64], strides = [1, 1]} : vector<8x96xf32> to vector<8x64xf32>
    %179 = arith.subf %176, %177 : vector<8x32xf32>
    %180 = vector.broadcast %149 : vector<8x1xf32> to vector<8x32xf32>
    %181 = arith.mulf %180, %179 : vector<8x32xf32>
    %182 = arith.addf %177, %181 : vector<8x32xf32>
    %183 = arith.subf %174, %125 : vector<8x32xf32>
    %184 = vector.broadcast %149 : vector<8x1xf32> to vector<8x32xf32>
    %185 = arith.mulf %184, %183 : vector<8x32xf32>
    %186 = arith.addf %125, %185 : vector<8x32xf32>
    %187 = arith.subf %171, %178 : vector<8x64xf32>
    %188 = vector.broadcast %149 : vector<8x1xf32> to vector<8x64xf32>
    %189 = arith.mulf %188, %187 : vector<8x64xf32>
    %190 = arith.addf %178, %189 : vector<8x64xf32>
    %191 = tpu.concatenate %182, %190 in 1 : vector<8x32xf32>, vector<8x64xf32> -> vector<8x96xf32>
    %192 = tpu.concatenate %191, %186 in 1 : vector<8x96xf32>, vector<8x32xf32> -> vector<8x128xf32>
    %c0_59 = arith.constant 0 : index
    %193 = arith.index_cast %140 : i32 to index
    %c0_60 = arith.constant 0 : index
    %c0_61 = arith.constant 0 : index
    %194 = vector.load %arg7[%c0_59, %193, %c0_60, %c0_61] : memref<1x8x8x128xf32, #tpu.memory_space<vmem>>, vector<1x1x8x128xf32>
    %195 = vector.shape_cast %194 : vector<1x1x8x128xf32> to vector<8x128xf32>
    %196 = vector.shape_cast %192 : vector<8x128xf32> to vector<1x1x8x128xf32>
    tpu.vector_store %arg7[%c0_59, %193, %c0_60, %c0_61], %196 {strides = array<i32>} : memref<1x8x8x128xf32, #tpu.memory_space<vmem>>, vector<1x1x8x128xf32>,
    %c3_i32 = arith.constant 3 : i32
    %c7_i32_62 = arith.constant 7 : i32
    %197 = arith.muli %arg0, %c7_i32_62 : i32
    %c2_i32_63 = arith.constant 2 : i32
    %198 = arith.muli %c2_i32_63, %arg0 : i32
    %c1_i32_64 = arith.constant 1 : i32
    %199 = arith.subi %c1_i32_64, %198 : i32
    %200 = arith.muli %199, %c3_i32 : i32
    %201 = arith.addi %197, %200 : i32
    %202 = arith.index_cast %201 : i32 to index
    %c0_65 = arith.constant 0 : index
    %c0_66 = arith.constant 0 : index
    %203 = vector.load %arg10[%202, %c0_65, %c0_66] : memref<8x8x192xf32, #tpu.memory_space<vmem>>, vector<1x8x192xf32>
    %204 = vector.shape_cast %203 : vector<1x8x192xf32> to vector<8x192xf32>
    %c0_67 = arith.constant 0 : index
    %c0_68 = arith.constant 0 : index
    %205 = vector.load %arg5[%c0_67, %c0_68] : memref<96x192xf32, #tpu.memory_space<vmem>>, vector<96x192xf32>
    %cst_69 = arith.constant dense<0.000000e+00> : vector<8x192xf32>
    %206 = tpu.matmul %191, %205, %cst_69 {dimension_numbers = #tpu.dot_dimension_numbers<[1], [0], [0], [1], [0, 0, 1, 1], [], []>} : vector<8x96xf32>, vector<96x192xf32>, vector<8x192xf32> -> vector<8x192xf32>
    %207 = arith.addf %204, %206 : vector<8x192xf32>
    %208 = arith.index_cast %201 : i32 to index
    %c0_70 = arith.constant 0 : index
    %c0_71 = arith.constant 0 : index
    %209 = vector.load %arg3[%208, %c0_70, %c0_71] : memref<8x8x1xf32, #tpu.memory_space<vmem>>, vector<1x8x1xf32>
    %210 = vector.shape_cast %209 : vector<1x8x1xf32> to vector<8x1xf32>
    %211 = vector.extract_strided_slice %207 {offsets = [0, 0], sizes = [8, 32], strides = [1, 1]} : vector<8x192xf32> to vector<8x32xf32>
    %212 = arith.negf %211 : vector<8x32xf32>
    %213 = math.exp %212 : vector<8x32xf32>
    %cst_72 = arith.constant 1.000000e+00 : f32
    %214 = vector.broadcast %cst_72 : f32 to vector<8x32xf32>
    %215 = arith.addf %214, %213 : vector<8x32xf32>
    %216 = arith.divf %214, %215 : vector<8x32xf32>
    %217 = vector.extract_strided_slice %207 {offsets = [0, 32], sizes = [8, 32], strides = [1, 1]} : vector<8x192xf32> to vector<8x32xf32>
    %218 = arith.negf %217 : vector<8x32xf32>
    %219 = math.exp %218 : vector<8x32xf32>
    %cst_73 = arith.constant 1.000000e+00 : f32
    %220 = vector.broadcast %cst_73 : f32 to vector<8x32xf32>
    %221 = arith.addf %220, %219 : vector<8x32xf32>
    %222 = arith.divf %220, %221 : vector<8x32xf32>
    %223 = vector.extract_strided_slice %207 {offsets = [0, 64], sizes = [8, 32], strides = [1, 1]} : vector<8x192xf32> to vector<8x32xf32>
    %224 = math.tanh %223 : vector<8x32xf32>
    %225 = vector.extract_strided_slice %207 {offsets = [0, 96], sizes = [8, 32], strides = [1, 1]} : vector<8x192xf32> to vector<8x32xf32>
    %226 = arith.negf %225 : vector<8x32xf32>
    %227 = math.exp %226 : vector<8x32xf32>
    %cst_74 = arith.constant 1.000000e+00 : f32
    %228 = vector.broadcast %cst_74 : f32 to vector<8x32xf32>
    %229 = arith.addf %228, %227 : vector<8x32xf32>
    %230 = arith.divf %228, %229 : vector<8x32xf32>
    %231 = vector.extract_strided_slice %207 {offsets = [0, 128], sizes = [8, 64], strides = [1, 1]} : vector<8x192xf32> to vector<8x64xf32>
    %232 = math.tanh %231 : vector<8x64xf32>
    %233 = arith.mulf %222, %186 : vector<8x32xf32>
    %234 = arith.mulf %216, %224 : vector<8x32xf32>
    %235 = arith.addf %233, %234 : vector<8x32xf32>
    %236 = math.tanh %235 : vector<8x32xf32>
    %237 = arith.mulf %230, %236 : vector<8x32xf32>
    %238 = vector.extract_strided_slice %191 {offsets = [0, 0], sizes = [8, 32], strides = [1, 1]} : vector<8x96xf32> to vector<8x32xf32>
    %239 = vector.extract_strided_slice %191 {offsets = [0, 32], sizes = [8, 64], strides = [1, 1]} : vector<8x96xf32> to vector<8x64xf32>
    %240 = arith.subf %237, %238 : vector<8x32xf32>
    %241 = vector.broadcast %210 : vector<8x1xf32> to vector<8x32xf32>
    %242 = arith.mulf %241, %240 : vector<8x32xf32>
    %243 = arith.addf %238, %242 : vector<8x32xf32>
    %244 = arith.subf %235, %186 : vector<8x32xf32>
    %245 = vector.broadcast %210 : vector<8x1xf32> to vector<8x32xf32>
    %246 = arith.mulf %245, %244 : vector<8x32xf32>
    %247 = arith.addf %186, %246 : vector<8x32xf32>
    %248 = arith.subf %232, %239 : vector<8x64xf32>
    %249 = vector.broadcast %210 : vector<8x1xf32> to vector<8x64xf32>
    %250 = arith.mulf %249, %248 : vector<8x64xf32>
    %251 = arith.addf %239, %250 : vector<8x64xf32>
    %252 = tpu.concatenate %243, %251 in 1 : vector<8x32xf32>, vector<8x64xf32> -> vector<8x96xf32>
    %253 = tpu.concatenate %252, %247 in 1 : vector<8x96xf32>, vector<8x32xf32> -> vector<8x128xf32>
    %c0_75 = arith.constant 0 : index
    %254 = arith.index_cast %201 : i32 to index
    %c0_76 = arith.constant 0 : index
    %c0_77 = arith.constant 0 : index
    %255 = vector.load %arg7[%c0_75, %254, %c0_76, %c0_77] : memref<1x8x8x128xf32, #tpu.memory_space<vmem>>, vector<1x1x8x128xf32>
    %256 = vector.shape_cast %255 : vector<1x1x8x128xf32> to vector<8x128xf32>
    %257 = vector.shape_cast %253 : vector<8x128xf32> to vector<1x1x8x128xf32>
    tpu.vector_store %arg7[%c0_75, %254, %c0_76, %c0_77], %257 {strides = array<i32>} : memref<1x8x8x128xf32, #tpu.memory_space<vmem>>, vector<1x1x8x128xf32>,
    %c4_i32 = arith.constant 4 : i32
    %c7_i32_78 = arith.constant 7 : i32
    %258 = arith.muli %arg0, %c7_i32_78 : i32
    %c2_i32_79 = arith.constant 2 : i32
    %259 = arith.muli %c2_i32_79, %arg0 : i32
    %c1_i32_80 = arith.constant 1 : i32
    %260 = arith.subi %c1_i32_80, %259 : i32
    %261 = arith.muli %260, %c4_i32 : i32
    %262 = arith.addi %258, %261 : i32
    %263 = arith.index_cast %262 : i32 to index
    %c0_81 = arith.constant 0 : index
    %c0_82 = arith.constant 0 : index
    %264 = vector.load %arg10[%263, %c0_81, %c0_82] : memref<8x8x192xf32, #tpu.memory_space<vmem>>, vector<1x8x192xf32>
    %265 = vector.shape_cast %264 : vector<1x8x192xf32> to vector<8x192xf32>
    %c0_83 = arith.constant 0 : index
    %c0_84 = arith.constant 0 : index
    %266 = vector.load %arg5[%c0_83, %c0_84] : memref<96x192xf32, #tpu.memory_space<vmem>>, vector<96x192xf32>
    %cst_85 = arith.constant dense<0.000000e+00> : vector<8x192xf32>
    %267 = tpu.matmul %252, %266, %cst_85 {dimension_numbers = #tpu.dot_dimension_numbers<[1], [0], [0], [1], [0, 0, 1, 1], [], []>} : vector<8x96xf32>, vector<96x192xf32>, vector<8x192xf32> -> vector<8x192xf32>
    %268 = arith.addf %265, %267 : vector<8x192xf32>
    %269 = arith.index_cast %262 : i32 to index
    %c0_86 = arith.constant 0 : index
    %c0_87 = arith.constant 0 : index
    %270 = vector.load %arg3[%269, %c0_86, %c0_87] : memref<8x8x1xf32, #tpu.memory_space<vmem>>, vector<1x8x1xf32>
    %271 = vector.shape_cast %270 : vector<1x8x1xf32> to vector<8x1xf32>
    %272 = vector.extract_strided_slice %268 {offsets = [0, 0], sizes = [8, 32], strides = [1, 1]} : vector<8x192xf32> to vector<8x32xf32>
    %273 = arith.negf %272 : vector<8x32xf32>
    %274 = math.exp %273 : vector<8x32xf32>
    %cst_88 = arith.constant 1.000000e+00 : f32
    %275 = vector.broadcast %cst_88 : f32 to vector<8x32xf32>
    %276 = arith.addf %275, %274 : vector<8x32xf32>
    %277 = arith.divf %275, %276 : vector<8x32xf32>
    %278 = vector.extract_strided_slice %268 {offsets = [0, 32], sizes = [8, 32], strides = [1, 1]} : vector<8x192xf32> to vector<8x32xf32>
    %279 = arith.negf %278 : vector<8x32xf32>
    %280 = math.exp %279 : vector<8x32xf32>
    %cst_89 = arith.constant 1.000000e+00 : f32
    %281 = vector.broadcast %cst_89 : f32 to vector<8x32xf32>
    %282 = arith.addf %281, %280 : vector<8x32xf32>
    %283 = arith.divf %281, %282 : vector<8x32xf32>
    %284 = vector.extract_strided_slice %268 {offsets = [0, 64], sizes = [8, 32], strides = [1, 1]} : vector<8x192xf32> to vector<8x32xf32>
    %285 = math.tanh %284 : vector<8x32xf32>
    %286 = vector.extract_strided_slice %268 {offsets = [0, 96], sizes = [8, 32], strides = [1, 1]} : vector<8x192xf32> to vector<8x32xf32>
    %287 = arith.negf %286 : vector<8x32xf32>
    %288 = math.exp %287 : vector<8x32xf32>
    %cst_90 = arith.constant 1.000000e+00 : f32
    %289 = vector.broadcast %cst_90 : f32 to vector<8x32xf32>
    %290 = arith.addf %289, %288 : vector<8x32xf32>
    %291 = arith.divf %289, %290 : vector<8x32xf32>
    %292 = vector.extract_strided_slice %268 {offsets = [0, 128], sizes = [8, 64], strides = [1, 1]} : vector<8x192xf32> to vector<8x64xf32>
    %293 = math.tanh %292 : vector<8x64xf32>
    %294 = arith.mulf %283, %247 : vector<8x32xf32>
    %295 = arith.mulf %277, %285 : vector<8x32xf32>
    %296 = arith.addf %294, %295 : vector<8x32xf32>
    %297 = math.tanh %296 : vector<8x32xf32>
    %298 = arith.mulf %291, %297 : vector<8x32xf32>
    %299 = vector.extract_strided_slice %252 {offsets = [0, 0], sizes = [8, 32], strides = [1, 1]} : vector<8x96xf32> to vector<8x32xf32>
    %300 = vector.extract_strided_slice %252 {offsets = [0, 32], sizes = [8, 64], strides = [1, 1]} : vector<8x96xf32> to vector<8x64xf32>
    %301 = arith.subf %298, %299 : vector<8x32xf32>
    %302 = vector.broadcast %271 : vector<8x1xf32> to vector<8x32xf32>
    %303 = arith.mulf %302, %301 : vector<8x32xf32>
    %304 = arith.addf %299, %303 : vector<8x32xf32>
    %305 = arith.subf %296, %247 : vector<8x32xf32>
    %306 = vector.broadcast %271 : vector<8x1xf32> to vector<8x32xf32>
    %307 = arith.mulf %306, %305 : vector<8x32xf32>
    %308 = arith.addf %247, %307 : vector<8x32xf32>
    %309 = arith.subf %293, %300 : vector<8x64xf32>
    %310 = vector.broadcast %271 : vector<8x1xf32> to vector<8x64xf32>
    %311 = arith.mulf %310, %309 : vector<8x64xf32>
    %312 = arith.addf %300, %311 : vector<8x64xf32>
    %313 = tpu.concatenate %304, %312 in 1 : vector<8x32xf32>, vector<8x64xf32> -> vector<8x96xf32>
    %314 = tpu.concatenate %313, %308 in 1 : vector<8x96xf32>, vector<8x32xf32> -> vector<8x128xf32>
    %c0_91 = arith.constant 0 : index
    %315 = arith.index_cast %262 : i32 to index
    %c0_92 = arith.constant 0 : index
    %c0_93 = arith.constant 0 : index
    %316 = vector.load %arg7[%c0_91, %315, %c0_92, %c0_93] : memref<1x8x8x128xf32, #tpu.memory_space<vmem>>, vector<1x1x8x128xf32>
    %317 = vector.shape_cast %316 : vector<1x1x8x128xf32> to vector<8x128xf32>
    %318 = vector.shape_cast %314 : vector<8x128xf32> to vector<1x1x8x128xf32>
    tpu.vector_store %arg7[%c0_91, %315, %c0_92, %c0_93], %318 {strides = array<i32>} : memref<1x8x8x128xf32, #tpu.memory_space<vmem>>, vector<1x1x8x128xf32>,
    %c5_i32 = arith.constant 5 : i32
    %c7_i32_94 = arith.constant 7 : i32
    %319 = arith.muli %arg0, %c7_i32_94 : i32
    %c2_i32_95 = arith.constant 2 : i32
    %320 = arith.muli %c2_i32_95, %arg0 : i32
    %c1_i32_96 = arith.constant 1 : i32
    %321 = arith.subi %c1_i32_96, %320 : i32
    %322 = arith.muli %321, %c5_i32 : i32
    %323 = arith.addi %319, %322 : i32
    %324 = arith.index_cast %323 : i32 to index
    %c0_97 = arith.constant 0 : index
    %c0_98 = arith.constant 0 : index
    %325 = vector.load %arg10[%324, %c0_97, %c0_98] : memref<8x8x192xf32, #tpu.memory_space<vmem>>, vector<1x8x192xf32>
    %326 = vector.shape_cast %325 : vector<1x8x192xf32> to vector<8x192xf32>
    %c0_99 = arith.constant 0 : index
    %c0_100 = arith.constant 0 : index
    %327 = vector.load %arg5[%c0_99, %c0_100] : memref<96x192xf32, #tpu.memory_space<vmem>>, vector<96x192xf32>
    %cst_101 = arith.constant dense<0.000000e+00> : vector<8x192xf32>
    %328 = tpu.matmul %313, %327, %cst_101 {dimension_numbers = #tpu.dot_dimension_numbers<[1], [0], [0], [1], [0, 0, 1, 1], [], []>} : vector<8x96xf32>, vector<96x192xf32>, vector<8x192xf32> -> vector<8x192xf32>
    %329 = arith.addf %326, %328 : vector<8x192xf32>
    %330 = arith.index_cast %323 : i32 to index
    %c0_102 = arith.constant 0 : index
    %c0_103 = arith.constant 0 : index
    %331 = vector.load %arg3[%330, %c0_102, %c0_103] : memref<8x8x1xf32, #tpu.memory_space<vmem>>, vector<1x8x1xf32>
    %332 = vector.shape_cast %331 : vector<1x8x1xf32> to vector<8x1xf32>
    %333 = vector.extract_strided_slice %329 {offsets = [0, 0], sizes = [8, 32], strides = [1, 1]} : vector<8x192xf32> to vector<8x32xf32>
    %334 = arith.negf %333 : vector<8x32xf32>
    %335 = math.exp %334 : vector<8x32xf32>
    %cst_104 = arith.constant 1.000000e+00 : f32
    %336 = vector.broadcast %cst_104 : f32 to vector<8x32xf32>
    %337 = arith.addf %336, %335 : vector<8x32xf32>
    %338 = arith.divf %336, %337 : vector<8x32xf32>
    %339 = vector.extract_strided_slice %329 {offsets = [0, 32], sizes = [8, 32], strides = [1, 1]} : vector<8x192xf32> to vector<8x32xf32>
    %340 = arith.negf %339 : vector<8x32xf32>
    %341 = math.exp %340 : vector<8x32xf32>
    %cst_105 = arith.constant 1.000000e+00 : f32
    %342 = vector.broadcast %cst_105 : f32 to vector<8x32xf32>
    %343 = arith.addf %342, %341 : vector<8x32xf32>
    %344 = arith.divf %342, %343 : vector<8x32xf32>
    %345 = vector.extract_strided_slice %329 {offsets = [0, 64], sizes = [8, 32], strides = [1, 1]} : vector<8x192xf32> to vector<8x32xf32>
    %346 = math.tanh %345 : vector<8x32xf32>
    %347 = vector.extract_strided_slice %329 {offsets = [0, 96], sizes = [8, 32], strides = [1, 1]} : vector<8x192xf32> to vector<8x32xf32>
    %348 = arith.negf %347 : vector<8x32xf32>
    %349 = math.exp %348 : vector<8x32xf32>
    %cst_106 = arith.constant 1.000000e+00 : f32
    %350 = vector.broadcast %cst_106 : f32 to vector<8x32xf32>
    %351 = arith.addf %350, %349 : vector<8x32xf32>
    %352 = arith.divf %350, %351 : vector<8x32xf32>
    %353 = vector.extract_strided_slice %329 {offsets = [0, 128], sizes = [8, 64], strides = [1, 1]} : vector<8x192xf32> to vector<8x64xf32>
    %354 = math.tanh %353 : vector<8x64xf32>
    %355 = arith.mulf %344, %308 : vector<8x32xf32>
    %356 = arith.mulf %338, %346 : vector<8x32xf32>
    %357 = arith.addf %355, %356 : vector<8x32xf32>
    %358 = math.tanh %357 : vector<8x32xf32>
    %359 = arith.mulf %352, %358 : vector<8x32xf32>
    %360 = vector.extract_strided_slice %313 {offsets = [0, 0], sizes = [8, 32], strides = [1, 1]} : vector<8x96xf32> to vector<8x32xf32>
    %361 = vector.extract_strided_slice %313 {offsets = [0, 32], sizes = [8, 64], strides = [1, 1]} : vector<8x96xf32> to vector<8x64xf32>
    %362 = arith.subf %359, %360 : vector<8x32xf32>
    %363 = vector.broadcast %332 : vector<8x1xf32> to vector<8x32xf32>
    %364 = arith.mulf %363, %362 : vector<8x32xf32>
    %365 = arith.addf %360, %364 : vector<8x32xf32>
    %366 = arith.subf %357, %308 : vector<8x32xf32>
    %367 = vector.broadcast %332 : vector<8x1xf32> to vector<8x32xf32>
    %368 = arith.mulf %367, %366 : vector<8x32xf32>
    %369 = arith.addf %308, %368 : vector<8x32xf32>
    %370 = arith.subf %354, %361 : vector<8x64xf32>
    %371 = vector.broadcast %332 : vector<8x1xf32> to vector<8x64xf32>
    %372 = arith.mulf %371, %370 : vector<8x64xf32>
    %373 = arith.addf %361, %372 : vector<8x64xf32>
    %374 = tpu.concatenate %365, %373 in 1 : vector<8x32xf32>, vector<8x64xf32> -> vector<8x96xf32>
    %375 = tpu.concatenate %374, %369 in 1 : vector<8x96xf32>, vector<8x32xf32> -> vector<8x128xf32>
    %c0_107 = arith.constant 0 : index
    %376 = arith.index_cast %323 : i32 to index
    %c0_108 = arith.constant 0 : index
    %c0_109 = arith.constant 0 : index
    %377 = vector.load %arg7[%c0_107, %376, %c0_108, %c0_109] : memref<1x8x8x128xf32, #tpu.memory_space<vmem>>, vector<1x1x8x128xf32>
    %378 = vector.shape_cast %377 : vector<1x1x8x128xf32> to vector<8x128xf32>
    %379 = vector.shape_cast %375 : vector<8x128xf32> to vector<1x1x8x128xf32>
    tpu.vector_store %arg7[%c0_107, %376, %c0_108, %c0_109], %379 {strides = array<i32>} : memref<1x8x8x128xf32, #tpu.memory_space<vmem>>, vector<1x1x8x128xf32>,
    %c6_i32 = arith.constant 6 : i32
    %c7_i32_110 = arith.constant 7 : i32
    %380 = arith.muli %arg0, %c7_i32_110 : i32
    %c2_i32_111 = arith.constant 2 : i32
    %381 = arith.muli %c2_i32_111, %arg0 : i32
    %c1_i32_112 = arith.constant 1 : i32
    %382 = arith.subi %c1_i32_112, %381 : i32
    %383 = arith.muli %382, %c6_i32 : i32
    %384 = arith.addi %380, %383 : i32
    %385 = arith.index_cast %384 : i32 to index
    %c0_113 = arith.constant 0 : index
    %c0_114 = arith.constant 0 : index
    %386 = vector.load %arg10[%385, %c0_113, %c0_114] : memref<8x8x192xf32, #tpu.memory_space<vmem>>, vector<1x8x192xf32>
    %387 = vector.shape_cast %386 : vector<1x8x192xf32> to vector<8x192xf32>
    %c0_115 = arith.constant 0 : index
    %c0_116 = arith.constant 0 : index
    %388 = vector.load %arg5[%c0_115, %c0_116] : memref<96x192xf32, #tpu.memory_space<vmem>>, vector<96x192xf32>
    %cst_117 = arith.constant dense<0.000000e+00> : vector<8x192xf32>
    %389 = tpu.matmul %374, %388, %cst_117 {dimension_numbers = #tpu.dot_dimension_numbers<[1], [0], [0], [1], [0, 0, 1, 1], [], []>} : vector<8x96xf32>, vector<96x192xf32>, vector<8x192xf32> -> vector<8x192xf32>
    %390 = arith.addf %387, %389 : vector<8x192xf32>
    %391 = arith.index_cast %384 : i32 to index
    %c0_118 = arith.constant 0 : index
    %c0_119 = arith.constant 0 : index
    %392 = vector.load %arg3[%391, %c0_118, %c0_119] : memref<8x8x1xf32, #tpu.memory_space<vmem>>, vector<1x8x1xf32>
    %393 = vector.shape_cast %392 : vector<1x8x1xf32> to vector<8x1xf32>
    %394 = vector.extract_strided_slice %390 {offsets = [0, 0], sizes = [8, 32], strides = [1, 1]} : vector<8x192xf32> to vector<8x32xf32>
    %395 = arith.negf %394 : vector<8x32xf32>
    %396 = math.exp %395 : vector<8x32xf32>
    %cst_120 = arith.constant 1.000000e+00 : f32
    %397 = vector.broadcast %cst_120 : f32 to vector<8x32xf32>
    %398 = arith.addf %397, %396 : vector<8x32xf32>
    %399 = arith.divf %397, %398 : vector<8x32xf32>
    %400 = vector.extract_strided_slice %390 {offsets = [0, 32], sizes = [8, 32], strides = [1, 1]} : vector<8x192xf32> to vector<8x32xf32>
    %401 = arith.negf %400 : vector<8x32xf32>
    %402 = math.exp %401 : vector<8x32xf32>
    %cst_121 = arith.constant 1.000000e+00 : f32
    %403 = vector.broadcast %cst_121 : f32 to vector<8x32xf32>
    %404 = arith.addf %403, %402 : vector<8x32xf32>
    %405 = arith.divf %403, %404 : vector<8x32xf32>
    %406 = vector.extract_strided_slice %390 {offsets = [0, 64], sizes = [8, 32], strides = [1, 1]} : vector<8x192xf32> to vector<8x32xf32>
    %407 = math.tanh %406 : vector<8x32xf32>
    %408 = vector.extract_strided_slice %390 {offsets = [0, 96], sizes = [8, 32], strides = [1, 1]} : vector<8x192xf32> to vector<8x32xf32>
    %409 = arith.negf %408 : vector<8x32xf32>
    %410 = math.exp %409 : vector<8x32xf32>
    %cst_122 = arith.constant 1.000000e+00 : f32
    %411 = vector.broadcast %cst_122 : f32 to vector<8x32xf32>
    %412 = arith.addf %411, %410 : vector<8x32xf32>
    %413 = arith.divf %411, %412 : vector<8x32xf32>
    %414 = vector.extract_strided_slice %390 {offsets = [0, 128], sizes = [8, 64], strides = [1, 1]} : vector<8x192xf32> to vector<8x64xf32>
    %415 = math.tanh %414 : vector<8x64xf32>
    %416 = arith.mulf %405, %369 : vector<8x32xf32>
    %417 = arith.mulf %399, %407 : vector<8x32xf32>
    %418 = arith.addf %416, %417 : vector<8x32xf32>
    %419 = math.tanh %418 : vector<8x32xf32>
    %420 = arith.mulf %413, %419 : vector<8x32xf32>
    %421 = vector.extract_strided_slice %374 {offsets = [0, 0], sizes = [8, 32], strides = [1, 1]} : vector<8x96xf32> to vector<8x32xf32>
    %422 = vector.extract_strided_slice %374 {offsets = [0, 32], sizes = [8, 64], strides = [1, 1]} : vector<8x96xf32> to vector<8x64xf32>
    %423 = arith.subf %420, %421 : vector<8x32xf32>
    %424 = vector.broadcast %393 : vector<8x1xf32> to vector<8x32xf32>
    %425 = arith.mulf %424, %423 : vector<8x32xf32>
    %426 = arith.addf %421, %425 : vector<8x32xf32>
    %427 = arith.subf %418, %369 : vector<8x32xf32>
    %428 = vector.broadcast %393 : vector<8x1xf32> to vector<8x32xf32>
    %429 = arith.mulf %428, %427 : vector<8x32xf32>
    %430 = arith.addf %369, %429 : vector<8x32xf32>
    %431 = arith.subf %415, %422 : vector<8x64xf32>
    %432 = vector.broadcast %393 : vector<8x1xf32> to vector<8x64xf32>
    %433 = arith.mulf %432, %431 : vector<8x64xf32>
    %434 = arith.addf %422, %433 : vector<8x64xf32>
    %435 = tpu.concatenate %426, %434 in 1 : vector<8x32xf32>, vector<8x64xf32> -> vector<8x96xf32>
    %436 = tpu.concatenate %435, %430 in 1 : vector<8x96xf32>, vector<8x32xf32> -> vector<8x128xf32>
    %c0_123 = arith.constant 0 : index
    %437 = arith.index_cast %384 : i32 to index
    %c0_124 = arith.constant 0 : index
    %c0_125 = arith.constant 0 : index
    %438 = vector.load %arg7[%c0_123, %437, %c0_124, %c0_125] : memref<1x8x8x128xf32, #tpu.memory_space<vmem>>, vector<1x1x8x128xf32>
    %439 = vector.shape_cast %438 : vector<1x1x8x128xf32> to vector<8x128xf32>
    %440 = vector.shape_cast %436 : vector<8x128xf32> to vector<1x1x8x128xf32>
    tpu.vector_store %arg7[%c0_123, %437, %c0_124, %c0_125], %440 {strides = array<i32>} : memref<1x8x8x128xf32, #tpu.memory_space<vmem>>, vector<1x1x8x128xf32>,
    %c7_i32_126 = arith.constant 7 : i32
    %c7_i32_127 = arith.constant 7 : i32
    %441 = arith.muli %arg0, %c7_i32_127 : i32
    %c2_i32_128 = arith.constant 2 : i32
    %442 = arith.muli %c2_i32_128, %arg0 : i32
    %c1_i32_129 = arith.constant 1 : i32
    %443 = arith.subi %c1_i32_129, %442 : i32
    %444 = arith.muli %443, %c7_i32_126 : i32
    %445 = arith.addi %441, %444 : i32
    %446 = arith.index_cast %445 : i32 to index
    %c0_130 = arith.constant 0 : index
    %c0_131 = arith.constant 0 : index
    %447 = vector.load %arg10[%446, %c0_130, %c0_131] : memref<8x8x192xf32, #tpu.memory_space<vmem>>, vector<1x8x192xf32>
    %448 = vector.shape_cast %447 : vector<1x8x192xf32> to vector<8x192xf32>
    %c0_132 = arith.constant 0 : index
    %c0_133 = arith.constant 0 : index
    %449 = vector.load %arg5[%c0_132, %c0_133] : memref<96x192xf32, #tpu.memory_space<vmem>>, vector<96x192xf32>
    %cst_134 = arith.constant dense<0.000000e+00> : vector<8x192xf32>
    %450 = tpu.matmul %435, %449, %cst_134 {dimension_numbers = #tpu.dot_dimension_numbers<[1], [0], [0], [1], [0, 0, 1, 1], [], []>} : vector<8x96xf32>, vector<96x192xf32>, vector<8x192xf32> -> vector<8x192xf32>
    %451 = arith.addf %448, %450 : vector<8x192xf32>
    %452 = arith.index_cast %445 : i32 to index
    %c0_135 = arith.constant 0 : index
    %c0_136 = arith.constant 0 : index
    %453 = vector.load %arg3[%452, %c0_135, %c0_136] : memref<8x8x1xf32, #tpu.memory_space<vmem>>, vector<1x8x1xf32>
    %454 = vector.shape_cast %453 : vector<1x8x1xf32> to vector<8x1xf32>
    %455 = vector.extract_strided_slice %451 {offsets = [0, 0], sizes = [8, 32], strides = [1, 1]} : vector<8x192xf32> to vector<8x32xf32>
    %456 = arith.negf %455 : vector<8x32xf32>
    %457 = math.exp %456 : vector<8x32xf32>
    %cst_137 = arith.constant 1.000000e+00 : f32
    %458 = vector.broadcast %cst_137 : f32 to vector<8x32xf32>
    %459 = arith.addf %458, %457 : vector<8x32xf32>
    %460 = arith.divf %458, %459 : vector<8x32xf32>
    %461 = vector.extract_strided_slice %451 {offsets = [0, 32], sizes = [8, 32], strides = [1, 1]} : vector<8x192xf32> to vector<8x32xf32>
    %462 = arith.negf %461 : vector<8x32xf32>
    %463 = math.exp %462 : vector<8x32xf32>
    %cst_138 = arith.constant 1.000000e+00 : f32
    %464 = vector.broadcast %cst_138 : f32 to vector<8x32xf32>
    %465 = arith.addf %464, %463 : vector<8x32xf32>
    %466 = arith.divf %464, %465 : vector<8x32xf32>
    %467 = vector.extract_strided_slice %451 {offsets = [0, 64], sizes = [8, 32], strides = [1, 1]} : vector<8x192xf32> to vector<8x32xf32>
    %468 = math.tanh %467 : vector<8x32xf32>
    %469 = vector.extract_strided_slice %451 {offsets = [0, 96], sizes = [8, 32], strides = [1, 1]} : vector<8x192xf32> to vector<8x32xf32>
    %470 = arith.negf %469 : vector<8x32xf32>
    %471 = math.exp %470 : vector<8x32xf32>
    %cst_139 = arith.constant 1.000000e+00 : f32
    %472 = vector.broadcast %cst_139 : f32 to vector<8x32xf32>
    %473 = arith.addf %472, %471 : vector<8x32xf32>
    %474 = arith.divf %472, %473 : vector<8x32xf32>
    %475 = vector.extract_strided_slice %451 {offsets = [0, 128], sizes = [8, 64], strides = [1, 1]} : vector<8x192xf32> to vector<8x64xf32>
    %476 = math.tanh %475 : vector<8x64xf32>
    %477 = arith.mulf %466, %430 : vector<8x32xf32>
    %478 = arith.mulf %460, %468 : vector<8x32xf32>
    %479 = arith.addf %477, %478 : vector<8x32xf32>
    %480 = math.tanh %479 : vector<8x32xf32>
    %481 = arith.mulf %474, %480 : vector<8x32xf32>
    %482 = vector.extract_strided_slice %435 {offsets = [0, 0], sizes = [8, 32], strides = [1, 1]} : vector<8x96xf32> to vector<8x32xf32>
    %483 = vector.extract_strided_slice %435 {offsets = [0, 32], sizes = [8, 64], strides = [1, 1]} : vector<8x96xf32> to vector<8x64xf32>
    %484 = arith.subf %481, %482 : vector<8x32xf32>
    %485 = vector.broadcast %454 : vector<8x1xf32> to vector<8x32xf32>
    %486 = arith.mulf %485, %484 : vector<8x32xf32>
    %487 = arith.addf %482, %486 : vector<8x32xf32>
    %488 = arith.subf %479, %430 : vector<8x32xf32>
    %489 = vector.broadcast %454 : vector<8x1xf32> to vector<8x32xf32>
    %490 = arith.mulf %489, %488 : vector<8x32xf32>
    %491 = arith.addf %430, %490 : vector<8x32xf32>
    %492 = arith.subf %476, %483 : vector<8x64xf32>
    %493 = vector.broadcast %454 : vector<8x1xf32> to vector<8x64xf32>
    %494 = arith.mulf %493, %492 : vector<8x64xf32>
    %495 = arith.addf %483, %494 : vector<8x64xf32>
    %496 = tpu.concatenate %487, %495 in 1 : vector<8x32xf32>, vector<8x64xf32> -> vector<8x96xf32>
    %497 = tpu.concatenate %496, %491 in 1 : vector<8x96xf32>, vector<8x32xf32> -> vector<8x128xf32>
    %c0_140 = arith.constant 0 : index
    %498 = arith.index_cast %445 : i32 to index
    %c0_141 = arith.constant 0 : index
    %c0_142 = arith.constant 0 : index
    %499 = vector.load %arg7[%c0_140, %498, %c0_141, %c0_142] : memref<1x8x8x128xf32, #tpu.memory_space<vmem>>, vector<1x1x8x128xf32>
    %500 = vector.shape_cast %499 : vector<1x1x8x128xf32> to vector<8x128xf32>
    %501 = vector.shape_cast %497 : vector<8x128xf32> to vector<1x1x8x128xf32>
    tpu.vector_store %arg7[%c0_140, %498, %c0_141, %c0_142], %501 {strides = array<i32>} : memref<1x8x8x128xf32, #tpu.memory_space<vmem>>, vector<1x1x8x128xf32>,
    %c8_i32 = arith.constant 8 : i32
    %c0_143 = arith.constant 0 : index
    %c0_144 = arith.constant 0 : index
    %502 = vector.load %arg8[%c0_143, %c0_144] : memref<8x96xf32, #tpu.memory_space<vmem>>, vector<8x96xf32>
    tpu.vector_store %arg8[%c0_143, %c0_144], %496 {strides = array<i32>} : memref<8x96xf32, #tpu.memory_space<vmem>>, vector<8x96xf32>,
    %c0_145 = arith.constant 0 : index
    %c0_146 = arith.constant 0 : index
    %503 = vector.load %arg9[%c0_145, %c0_146] : memref<8x32xf32, #tpu.memory_space<vmem>>, vector<8x32xf32>
    tpu.vector_store %arg9[%c0_145, %c0_146], %491 {strides = array<i32>} : memref<8x32xf32, #tpu.memory_space<vmem>>, vector<8x32xf32>,
    return
  }
  func.func @transform_0(%arg0: i32, %arg1: i32) -> (i32, i32, i32) {
    %c0_i32 = arith.constant 0 : i32
    %0 = arith.muli %arg0, %c0_i32 : i32
    %c2_i32 = arith.constant 2 : i32
    %1 = arith.muli %c2_i32, %arg0 : i32
    %c1_i32 = arith.constant 1 : i32
    %2 = arith.subi %c1_i32, %1 : i32
    %3 = arith.muli %2, %arg1 : i32
    %4 = arith.addi %0, %3 : i32
    %c0_i32_0 = arith.constant 0 : i32
    %c0_i32_1 = arith.constant 0 : i32
    %c0_i32_2 = arith.constant 0 : i32
    return %4, %c0_i32_0, %c0_i32_1 : i32, i32, i32
  }
  func.func @transform_1(%arg0: i32, %arg1: i32) -> (i32, i32, i32) {
    %c0_i32 = arith.constant 0 : i32
    %0 = arith.muli %arg0, %c0_i32 : i32
    %c2_i32 = arith.constant 2 : i32
    %1 = arith.muli %c2_i32, %arg0 : i32
    %c1_i32 = arith.constant 1 : i32
    %2 = arith.subi %c1_i32, %1 : i32
    %3 = arith.muli %2, %arg1 : i32
    %4 = arith.addi %0, %3 : i32
    %c0_i32_0 = arith.constant 0 : i32
    %c0_i32_1 = arith.constant 0 : i32
    %c0_i32_2 = arith.constant 0 : i32
    return %4, %c0_i32_0, %c0_i32_1 : i32, i32, i32
  }
  func.func @transform_2(%arg0: i32, %arg1: i32) -> (i32, i32) {
    %c0_i32 = arith.constant 0 : i32
    %c0_i32_0 = arith.constant 0 : i32
    %c0_i32_1 = arith.constant 0 : i32
    return %c0_i32, %c0_i32_0 : i32, i32
  }
  func.func @transform_3(%arg0: i32, %arg1: i32) -> (i32, i32) {
    %c0_i32 = arith.constant 0 : i32
    %c0_i32_0 = arith.constant 0 : i32
    %c0_i32_1 = arith.constant 0 : i32
    return %c0_i32, %c0_i32_0 : i32, i32
  }
  func.func @transform_4(%arg0: i32, %arg1: i32) -> (i32, i32) {
    %c0_i32 = arith.constant 0 : i32
    %c0_i32_0 = arith.constant 0 : i32
    %c0_i32_1 = arith.constant 0 : i32
    return %c0_i32, %c0_i32_0 : i32, i32
  }
  func.func @transform_5(%arg0: i32, %arg1: i32) -> (i32, i32, i32, i32) {
    %c0_i32 = arith.constant 0 : i32
    %0 = arith.muli %arg0, %c0_i32 : i32
    %c2_i32 = arith.constant 2 : i32
    %1 = arith.muli %c2_i32, %arg0 : i32
    %c1_i32 = arith.constant 1 : i32
    %2 = arith.subi %c1_i32, %1 : i32
    %3 = arith.muli %2, %arg1 : i32
    %4 = arith.addi %0, %3 : i32
    %c0_i32_0 = arith.constant 0 : i32
    %c0_i32_1 = arith.constant 0 : i32
    %c0_i32_2 = arith.constant 0 : i32
    return %arg0, %4, %c0_i32_0, %c0_i32_1 : i32, i32, i32, i32
  }
}

</mosaic_0001>

<llo_original>
// kernel: bislstm_forward.1
$region0: #{bislstm_forward.1}
  #allocation0 [shape = 'u32[]', space=smem, size = 0x4, offset = 0x4, fixed_abs, tag = 'smem constant byte address 0x4 - core index']
  #allocation1 [shape = 'u32[144,128]{1,0:T(1,128)}', space=vmem, size = 0x12000, scoped, tag = 'internal scratch']
  #allocation2 [shape = 'f32[8,96]{1,0:T(8,128)}', space=vmem, size = 0x1000, scoped, tag = 'scratch operand']
  #allocation3 [shape = 'f32[8,32]{1,0:T(8,128)}', space=vmem, size = 0x1000, scoped, tag = 'scratch operand']
  #allocation4 [shape = 'f32[8,8,192]{2,1,0:T(8,128)}', space=vmem, size = 0x10000, scoped, tag = 'scratch operand']
  %s0 = inlined_call_operand.vmem [shape: bf16[8,8,16], index: 0, kind: input, shape index: {}]
  %s1 = inlined_call_operand.vmem [shape: f32[8,8,1], index: 1, kind: input, shape index: {}]
  %s2 = inlined_call_operand.vmem [shape: bf16[16,192], index: 2, kind: input, shape index: {}]
  %s3 = inlined_call_operand.vmem [shape: f32[96,192], index: 3, kind: input, shape index: {}]
  %s4 = inlined_call_operand.vmem [shape: f32[1,192], index: 4, kind: input, shape index: {}]
  %s5 = inlined_call_operand.vmem [shape: f32[2,8,8,128], index: 5, kind: output, shape index: {}]
  %s6 = sld [smem:[#allocation0]]
  $region57: #{bislstm_forward.1} parent=0
    _
  %s8 = ssub.s32 1, %s6
  %s9 = scalar_select 0, %s8, %s6
  loop: start=0, step=1, limit=4
  $region2: #{bislstm_forward.1} parent=0 // loop_pre_header
    _
  $region3: #{bislstm_forward.1} parent=0 // loop_header
    %s11 = sphi 0, %s15
    %p12 = scmp.ge.s32.totalorder %s11, 4
    %s18 = sphi 0, %s30
    %s19 = sphi 0, %s26
    %s20 = sphi 0, %s18
    %s21 = sphi 0, %s19
    %s22 = sphi 0, %s20
    %s23 = sphi 0, %s21
    %s39 = sphi 0, %s41
    %s42 = sphi 0, %s39
    %s43 = sphi 0, %s42
    %s59 = sphi 0, %s43
    %s71 = sphi 0, %s73
    %s74 = sphi 0, %s71
    %s75 = sphi 0, %s74
    %s91 = sphi 0, %s75
    %s95 = sphi 0, %s95
    %s97 = sphi 0, %s95
    %s98 = sphi 0, %s97
    %s112 = sphi 0, %s98
    %s116 = sphi 0, %s116
    %s118 = sphi 0, %s116
    %s119 = sphi 0, %s118
    %s133 = sphi 0, %s119
    %s137 = sphi 0, %s137
    %s139 = sphi 0, %s137
    %s140 = sphi 0, %s139
    %s154 = sphi 0, %s140
    %s168 = sphi 0, %s170
    %s171 = sphi 0, %s168
    %s172 = sphi 0, %s171
    %s188 = sphi 0, %s172
  $region4: #{bislstm_forward.1} parent=0 // loop_header_branch
    %14 = sbr.rel (%p12) target = $region8
  $region5: #{bislstm_forward.1} parent=0 // loop_body
    %s16 = ssub.s32 %s11, 1
    %s17 = ssub.s32 %s11, 2
    %s24 = sadd.s32 1, %s19
    %p25 = scmp.ge.s32.totalorder %s24, 1
    %s26 = scalar_select %p25, 0, %s24
    %s27 = sadd.s32 1, %s18
    %s28 = scalar_select %p25, %s27, %s18
    %p29 = scmp.ge.s32.totalorder %s28, 2
    %s30 = scalar_select %p29, 0, %s28
    %s31 = smul.u32 %s18, 2
    %s32 = ssub.s32 1, %s31
    %s33 = smul.u32 %s32, %s19
    %s34 = smul.u32 %s30, 2
    %s35 = ssub.s32 1, %s34
    %s36 = smul.u32 %s35, %s26
    %s37 = ssub.s32 %s33, %s36
    %p38 = scmp.eq.s32.totalorder %s37, 0
    %s40 = sadd.s32 %s39, 1
    %s41 = scalar_select %p38, %s39, %s40
    %p44 = pneg %p38
    %p45 = scmp.eq.s32.totalorder %s11, 1
    %p46 = por %p44, %p45
    %p47 = scmp.ne.s32.totalorder %s39, %s42
    %p48 = scmp.eq.s32.totalorder %s11, 0
    %p49 = por %p47, %p48
    %p50 = scmp.ne.s32.totalorder %s39, %s42
    %p51 = scmp.eq.s32.totalorder %s16, 1
    %p52 = por %p50, %p51
    %p53 = scmp.ne.s32.totalorder %s42, %s43
    %p54 = scmp.eq.s32.totalorder %s16, 0
    %p55 = por %p53, %p54
    %p56 = scmp.ne.s32.totalorder %s42, %s43
    %p57 = scmp.eq.s32.totalorder %s17, 1
    %p58 = por %p56, %p57
    %p60 = scmp.ne.s32.totalorder %s43, %s59
    %p61 = scmp.eq.s32.totalorder %s17, 0
    %p62 = por %p60, %p61
    %s63 = smul.u32 %s18, 2
    %s64 = ssub.s32 1, %s63
    %s65 = smul.u32 %s64, %s19
    %s66 = smul.u32 %s30, 2
    %s67 = ssub.s32 1, %s66
    %s68 = smul.u32 %s67, %s26
    %s69 = ssub.s32 %s65, %s68
    %p70 = scmp.eq.s32.totalorder %s69, 0
    %s72 = sadd.s32 %s71, 1
    %s73 = scalar_select %p70, %s71, %s72
    %p76 = pneg %p70
    %p77 = scmp.eq.s32.totalorder %s11, 1
    %p78 = por %p76, %p77
    %p79 = scmp.ne.s32.totalorder %s71, %s74
    %p80 = scmp.eq.s32.totalorder %s11, 0
    %p81 = por %p79, %p80
    %p82 = scmp.ne.s32.totalorder %s71, %s74
    %p83 = scmp.eq.s32.totalorder %s16, 1
    %p84 = por %p82, %p83
    %p85 = scmp.ne.s32.totalorder %s74, %s75
    %p86 = scmp.eq.s32.totalorder %s16, 0
    %p87 = por %p85, %p86
    %p88 = scmp.ne.s32.totalorder %s74, %s75
    %p89 = scmp.eq.s32.totalorder %s17, 1
    %p90 = por %p88, %p89
    %p92 = scmp.ne.s32.totalorder %s75, %s91
    %p93 = scmp.eq.s32.totalorder %s17, 0
    %p94 = por %p92, %p93
    %s96 = sadd.s32 %s95, 1
    %p99 = scmp.eq.s32.totalorder %s11, 1
    %p100 = scmp.ne.s32.totalorder %s95, %s97
    %p101 = scmp.eq.s32.totalorder %s11, 0
    %p102 = por %p100, %p101
    %p103 = scmp.ne.s32.totalorder %s95, %s97
    %p104 = scmp.eq.s32.totalorder %s16, 1
    %p105 = por %p103, %p104
    %p106 = scmp.ne.s32.totalorder %s97, %s98
    %p107 = scmp.eq.s32.totalorder %s16, 0
    %p108 = por %p106, %p107
    %p109 = scmp.ne.s32.totalorder %s97, %s98
    %p110 = scmp.eq.s32.totalorder %s17, 1
    %p111 = por %p109, %p110
    %p113 = scmp.ne.s32.totalorder %s98, %s112
    %p114 = scmp.eq.s32.totalorder %s17, 0
    %p115 = por %p113, %p114
    %s117 = sadd.s32 %s116, 1
    %p120 = scmp.eq.s32.totalorder %s11, 1
    %p121 = scmp.ne.s32.totalorder %s116, %s118
    %p122 = scmp.eq.s32.totalorder %s11, 0
    %p123 = por %p121, %p122
    %p124 = scmp.ne.s32.totalorder %s116, %s118
    %p125 = scmp.eq.s32.totalorder %s16, 1
    %p126 = por %p124, %p125
    %p127 = scmp.ne.s32.totalorder %s118, %s119
    %p128 = scmp.eq.s32.totalorder %s16, 0
    %p129 = por %p127, %p128
    %p130 = scmp.ne.s32.totalorder %s118, %s119
    %p131 = scmp.eq.s32.totalorder %s17, 1
    %p132 = por %p130, %p131
    %p134 = scmp.ne.s32.totalorder %s119, %s133
    %p135 = scmp.eq.s32.totalorder %s17, 0
    %p136 = por %p134, %p135
    %s138 = sadd.s32 %s137, 1
    %p141 = scmp.eq.s32.totalorder %s11, 1
    %p142 = scmp.ne.s32.totalorder %s137, %s139
    %p143 = scmp.eq.s32.totalorder %s11, 0
    %p144 = por %p142, %p143
    %p145 = scmp.ne.s32.totalorder %s137, %s139
    %p146 = scmp.eq.s32.totalorder %s16, 1
    %p147 = por %p145, %p146
    %p148 = scmp.ne.s32.totalorder %s139, %s140
    %p149 = scmp.eq.s32.totalorder %s16, 0
    %p150 = por %p148, %p149
    %p151 = scmp.ne.s32.totalorder %s139, %s140
    %p152 = scmp.eq.s32.totalorder %s17, 1
    %p153 = por %p151, %p152
    %p155 = scmp.ne.s32.totalorder %s140, %s154
    %p156 = scmp.eq.s32.totalorder %s17, 0
    %p157 = por %p155, %p156
    %s158 = smul.u32 %s18, 2
    %s159 = ssub.s32 1, %s158
    %s160 = smul.u32 %s159, %s19
    %s161 = smul.u32 %s30, 2
    %s162 = ssub.s32 1, %s161
    %s163 = smul.u32 %s162, %s26
    %s164 = ssub.s32 %s18, %s30
    %s165 = ssub.s32 %s160, %s163
    %s166 = sor.u32 %s164, %s165
    %p167 = scmp.eq.s32.totalorder %s166, 0
    %s169 = sadd.s32 %s168, 1
    %s170 = scalar_select %p167, %s168, %s169
    %p173 = pneg %p167
    %p174 = scmp.eq.s32.totalorder %s11, 1
    %p175 = por %p173, %p174
    %p176 = scmp.ne.s32.totalorder %s168, %s171
    %p177 = scmp.eq.s32.totalorder %s11, 0
    %p178 = por %p176, %p177
    %p179 = scmp.ne.s32.totalorder %s168, %s171
    %p180 = scmp.eq.s32.totalorder %s16, 1
    %p181 = por %p179, %p180
    %p182 = scmp.ne.s32.totalorder %s171, %s172
    %p183 = scmp.eq.s32.totalorder %s16, 0
    %p184 = por %p182, %p183
    %p185 = scmp.ne.s32.totalorder %s171, %s172
    %p186 = scmp.eq.s32.totalorder %s17, 1
    %p187 = por %p185, %p186
    %p189 = scmp.ne.s32.totalorder %s172, %s188
    %p190 = scmp.eq.s32.totalorder %s17, 0
    %p191 = por %p189, %p190
    %p192 = scmp.le.s32.totalorder 1, %s11
    %p193 = scmp.lt.s32.totalorder %s11, 3
    %p194 = pnand %p192, %p193
    %p195 = pneg %p194
    // Predicated region
    $region9: #{bislstm_forward.1} parent=5 // pred_check
      _
    $region10: #{bislstm_forward.1} parent=5 // pred_check_branch
      %197 = sbr.rel (%p194) target = $region12
    $region11: #{bislstm_forward.1} parent=5 // pred_region
      %s198 = ssub.s32 %s11, 1
      // Predicated region
      $region13: #{bislstm_forward.1} parent=11 // pred_check
        %p199 = pneg %p108
      $region14: #{bislstm_forward.1} parent=11 // pred_check_branch
        %201 = sbr.rel (%p199) target = $region16
      $region15: #{bislstm_forward.1} parent=11 // pred_region
        _
      $region16: #{bislstm_forward.1} parent=11 // pred_fallthru
        _
      // Predicated region
      $region17: #{bislstm_forward.1} parent=11 // pred_check
        %p202 = pneg %p129
      $region18: #{bislstm_forward.1} parent=11 // pred_check_branch
        %204 = sbr.rel (%p202) target = $region20
      $region19: #{bislstm_forward.1} parent=11 // pred_region
        _
      $region20: #{bislstm_forward.1} parent=11 // pred_fallthru
        _
      // Predicated region
      $region21: #{bislstm_forward.1} parent=11 // pred_check
        %p205 = pneg %p150
      $region22: #{bislstm_forward.1} parent=11 // pred_check_branch
        %207 = sbr.rel (%p205) target = $region24
      $region23: #{bislstm_forward.1} parent=11 // pred_region
        _
      $region24: #{bislstm_forward.1} parent=11 // pred_fallthru
        _
    $region12: #{bislstm_forward.1} parent=5 // pred_fallthru
      _
    %p208 = scmp.lt.s32.totalorder %s11, 2
    // Predicated region
    $region25: #{bislstm_forward.1} parent=5 // pred_check
      %p209 = pneg %p208
    $region26: #{bislstm_forward.1} parent=5 // pred_check_branch
      %211 = sbr.rel (%p209) target = $region28
    $region27: #{bislstm_forward.1} parent=5 // pred_region
      // Predicated region
      $region29: #{bislstm_forward.1} parent=27 // pred_check
        %p212 = pneg %p49
      $region30: #{bislstm_forward.1} parent=27 // pred_check_branch
        %214 = sbr.rel (%p212) target = $region32
      $region31: #{bislstm_forward.1} parent=27 // pred_region
        %s215 = smul.u32 %s18, 2
        %s216 = ssub.s32 1, %s215
        %s217 = smul.u32 %s216, %s19
        %s218 = smul.u32 8, %s217
        %p219 = scmp.lt.s32.totalorder %s218, 7
        %s220 = scalar_select %p219, %s218, 7
        %s221 = smul.addr %s220, 4
        %s222 = scalar_lea.vmem %s0, %s221
        %s223 = smul.u32 %s18, 2
        %s224 = ssub.s32 1, %s223
        %s225 = smul.u32 %s224, %s19
        %s226 = smul.u32 8, %s225
      $region32: #{bislstm_forward.1} parent=27 // pred_fallthru
        _
      // Predicated region
      $region33: #{bislstm_forward.1} parent=27 // pred_check
        %p227 = pneg %p81
      $region34: #{bislstm_forward.1} parent=27 // pred_check_branch
        %229 = sbr.rel (%p227) target = $region36
      $region35: #{bislstm_forward.1} parent=27 // pred_region
        %s230 = smul.u32 %s18, 2
        %s231 = ssub.s32 1, %s230
        %s232 = smul.u32 %s231, %s19
        %s233 = smul.u32 8, %s232
        %p234 = scmp.lt.s32.totalorder %s233, 7
        %s235 = scalar_select %p234, %s233, 7
        %s236 = smul.addr %s235, 8
        %s237 = scalar_lea.vmem %s1, %s236
        %s238 = smul.u32 %s18, 2
        %s239 = ssub.s32 1, %s238
        %s240 = smul.u32 %s239, %s19
        %s241 = smul.u32 8, %s240
      $region36: #{bislstm_forward.1} parent=27 // pred_fallthru
        _
    $region28: #{bislstm_forward.1} parent=5 // pred_fallthru
      _
    %p242 = scmp.le.s32.totalorder 1, %s11
    %p243 = scmp.lt.s32.totalorder %s11, 3
    %p244 = pnand %p242, %p243
    %p245 = pneg %p244
    // Predicated region
    $region37: #{bislstm_forward.1} parent=5 // pred_check
      _
    $region38: #{bislstm_forward.1} parent=5 // pred_check_branch
      %247 = sbr.rel (%p244) target = $region40
    $region39: #{bislstm_forward.1} parent=5 // pred_region
      %s248 = ssub.s32 %s11, 1
      %s249 = smul.u32 %s20, 2
      %s250 = ssub.s32 1, %s249
      %s251 = smul.u32 %s250, %s21
      %s252 = smul.u32 8, %s251
      %p253 = scmp.lt.s32.totalorder %s252, 7
      %s254 = scalar_select %p253, %s252, 7
      %s255 = smul.addr %s254, 4
      %s256 = scalar_lea.vmem %s0, %s255
      %p257 = pneg %p55
      %p258 = pneg %p52
      %s259 = smul.u32 %s20, 2
      %s260 = ssub.s32 1, %s259
      %s261 = smul.u32 %s260, %s21
      %s262 = smul.u32 8, %s261
      %p263 = scmp.lt.s32.totalorder %s262, 7
      %s264 = scalar_select %p263, %s262, 7
      %s265 = smul.addr %s264, 8
      %s266 = scalar_lea.vmem %s1, %s265
      %p267 = pneg %p87
      %p268 = pneg %p84
      %p269 = pneg %p108
      %p270 = pneg %p105
      %p271 = pneg %p129
      %p272 = pneg %p126
      %p273 = pneg %p150
      %p274 = pneg %p147
      %p275 = pneg %p184
      %p276 = pneg %p181
      %s277 = smul.u32 %s20, 2
      %s278 = ssub.s32 1, %s277
      %s279 = smul.u32 %s278, %s21
      %s280 = smul.u32 8, %s279
      %p281 = scmp.lt.s32.totalorder %s20, 1
      %s282 = scalar_select %p281, %s20, 1
      %p283 = scmp.lt.s32.totalorder %s280, 7
      %s284 = scalar_select %p283, %s280, 7
      %s285 = smul.addr %s282, 8
      %s286 = sadd.s32 %s284, %s285
      %s287 = smul.addr %s286, 8
      %s288 = scalar_lea.vmem %s5, %s287
      %s289 = smul.u32 %s20, 2
      %s290 = ssub.s32 1, %s289
      %s291 = smul.u32 %s290, %s21
      %s292 = smul.u32 8, %s291
      %p293 = scmp.lt.s32.totalorder %s292, 7
      %s294 = scalar_select %p293, %s292, 7
      %s295 = smul.addr %s294, 4
      %s296 = scalar_lea.vmem %s0, %s295
      %s297 = smul.u32 %s20, 2
      %s298 = ssub.s32 1, %s297
      %s299 = smul.u32 %s298, %s21
      %s300 = smul.u32 8, %s299
      %s301 = smul.u32 %s20, 2
      %s302 = ssub.s32 1, %s301
      %s303 = smul.u32 %s302, %s21
      %s304 = smul.u32 8, %s303
      %p305 = scmp.lt.s32.totalorder %s304, 7
      %s306 = scalar_select %p305, %s304, 7
      %s307 = smul.addr %s306, 8
      %s308 = scalar_lea.vmem %s1, %s307
      %s309 = smul.u32 %s20, 2
      %s310 = ssub.s32 1, %s309
      %s311 = smul.u32 %s310, %s21
      %s312 = smul.u32 8, %s311
      %s313 = smul.u32 %s20, 2
      %s314 = ssub.s32 1, %s313
      %s315 = smul.u32 %s314, %s21
      %s316 = smul.u32 8, %s315
      %p317 = scmp.lt.s32.totalorder %s20, 1
      %s318 = scalar_select %p317, %s20, 1
      %p319 = scmp.lt.s32.totalorder %s316, 7
      %s320 = scalar_select %p319, %s316, 7
      %s321 = smul.addr %s318, 8
      %s322 = sadd.s32 %s320, %s321
      %s323 = smul.addr %s322, 8
      %s324 = scalar_lea.vmem %s5, %s323
      %s325 = smul.u32 %s20, 2
      %s326 = ssub.s32 1, %s325
      %s327 = smul.u32 %s326, %s21
      %s328 = smul.u32 8, %s327
      %p330 = scmp.eq.s32.totalorder %s21, 0
      // Predicated region
      $region41: #{bislstm_forward.1} parent=39 // pred_check
        %p331 = pneg %p330
      $region42: #{bislstm_forward.1} parent=39 // pred_check_branch
        %333 = sbr.rel (%p331) target = $region44
      $region43: #{bislstm_forward.1} parent=39 // pred_region
        %vm334 = vcmask 785408
        %335 = vst.msk [vmem:[#allocation2] sm:$0xff] %vm334, 0.0
        %vm336 = vcmask 261120
        %337 = vst.msk [vmem:[#allocation3] sm:$0xff] %vm336, 0.0
      $region44: #{bislstm_forward.1} parent=39 // pred_fallthru
        _
      %v338 = vld [vmem:[%s296] sm:$0xf]
      %v339 = vld [vmem:[%s296 + $0x4] sm:$0xf]
      %v340 = vld [vmem:[%s296 + $0x8] sm:$0xf]
      %v341 = vld [vmem:[%s296 + $0xc] sm:$0xf]
      %v342 = vld [vmem:[%s296 + $0x10] sm:$0xf]
      %v343 = vld [vmem:[%s296 + $0x14] sm:$0xf]
      %v344 = vld [vmem:[%s296 + $0x18] sm:$0xf]
      %v345 = vld [vmem:[%s296 + $0x1c] sm:$0xf]
      %v346 = vld [vmem:[%s2] sm:$0xff]
      %v347 = vld [vmem:[%s2 + $0x8] sm:$0xff]
      %v348 = vld [vmem:[%s4] sm:$0x3]
      %v350 = vlaneseq
      %v351 = vshrl.u32 %v350, 7
      %v352 = vsub.s32 0, %v351
      %v353 = vrot.slane %v348, %v352
      %v354 = vlaneseq
      %v355 = vshrl.u32 %v354, 7
      %v356 = vsub.s32 1, %v355
      %v357 = vrot.slane %v348, %v356
      %v368 = vunpack.c.l.b16 %v338
      %v369 = vunpack.c.l.b16 %v339
      %v370 = vunpack.c.l.b16 %v340
      %v371 = vunpack.c.l.b16 %v341
      %v372 = vunpack.c.l.b16 %v342
      %v373 = vunpack.c.l.b16 %v343
      %v374 = vunpack.c.l.b16 %v344
      %v375 = vunpack.c.l.b16 %v345
      %v376 = vpack.c.b16 %v369, %v368
      %v377 = vpack.c.b16 %v371, %v370
      %v378 = vpack.c.b16 %v373, %v372
      %v379 = vpack.c.b16 %v375, %v374
      %v382 = vunpack.c.l.b16 %v346
      %v383 = vunpack.c.h.b16 %v346
      %v384 = vunpack.c.l.b16 %v347
      %v385 = vunpack.c.h.b16 %v347
      %v386 = vpack.c.b16 %v384, %v382
      %v387 = vpack.c.b16 %v385, %v383
      %vm390 = vcmask 130048
      %v392 = vsel %vm390, %v376, 0
      %v395 = vsel %vm390, %v377, 0
      %v398 = vsel %vm390, %v378, 0
      %v401 = vsel %vm390, %v379, 0
      %403 = vmatprep.subr.bf16.mxu0 %v387
      %404 = vmatpush1.bf16.msra.mxu0 %v386
      %405 = vmatprep.subr.bf16.mxu0 0
      %406 = vmatpush1.bf16.msra.mxu0 0
      %407 = vmatprep.subr.bf16.mxu0 0
      %408 = vmatpush1.bf16.msra.mxu0 0
      %409 = vmatprep.subr.bf16.mxu0 0
      %410 = vmatpush1.bf16.msra.mxu0 0
      %411 = vmatprep.subr.bf16.mxu0 0
      %412 = vmatpush1.bf16.msra.mxu0 0
      %413 = vmatprep.subr.bf16.mxu0 0
      %414 = vmatpush1.bf16.msra.mxu0 0
      %415 = vmatprep.subr.bf16.mxu0 0
      %416 = vmatpush1.bf16.msra.mxu0 0
      %417 = vmatprep.subr.bf16.mxu0 0
      %418 = vmatpush1.bf16.msra.mxu0 0
      %419 = vmatprep.subr.bf16.mxu0 0
      %420 = vmatpush1.bf16.msra.mxu0 0
      %421 = vmatprep.subr.bf16.mxu0 0
      %422 = vmatpush1.bf16.msra.mxu0 0
      %423 = vmatprep.subr.bf16.mxu0 0
      %424 = vmatpush1.bf16.msra.mxu0 0
      %425 = vmatprep.subr.bf16.mxu0 0
      %426 = vmatpush1.bf16.msra.mxu0 0
      %427 = vmatprep.subr.bf16.mxu0 0
      %428 = vmatpush1.bf16.msra.mxu0 0
      %429 = vmatprep.subr.bf16.mxu0 0
      %430 = vmatpush1.bf16.msra.mxu0 0
      %431 = vmatprep.subr.bf16.mxu0 0
      %432 = vmatpush1.bf16.msra.mxu0 0
      %433 = vmatprep.subr.bf16.mxu0 0
      %434 = vmatpush1.bf16.msra.mxu0 0
      %435 = vmatprep.mubr.bf16.mxu0 0
      %436 = vmatmul.mubr.bf16.gmra.mrb[0].mxu0 %v392
      %v437 = vpop.f32.mrb[0].mxu0
      %v438 = vadd.f32 %v353, %v437
      %v439 = vpop.f32.mrb[0].mxu0
      %v440 = vadd.f32 %v357, %v439
      %v441 = vpop.f32.mrb[0].mxu0
      %v442 = vadd.f32 %v353, %v441
      %v443 = vpop.f32.mrb[0].mxu0
      %v444 = vadd.f32 %v357, %v443
      %445 = vmatprep.mubr.bf16.mxu0 0
      %446 = vmatmul.mubr.bf16.gmra.mrb[0].mxu0 %v395
      %v447 = vpop.f32.mrb[0].mxu0
      %v448 = vadd.f32 %v353, %v447
      %v449 = vpop.f32.mrb[0].mxu0
      %v450 = vadd.f32 %v357, %v449
      %v451 = vpop.f32.mrb[0].mxu0
      %v452 = vadd.f32 %v353, %v451
      %v453 = vpop.f32.mrb[0].mxu0
      %v454 = vadd.f32 %v357, %v453
      %455 = vmatprep.mubr.bf16.mxu0 0
      %456 = vmatmul.mubr.bf16.gmra.mrb[0].mxu0 %v398
      %v457 = vpop.f32.mrb[0].mxu0
      %v458 = vadd.f32 %v353, %v457
      %v459 = vpop.f32.mrb[0].mxu0
      %v460 = vadd.f32 %v357, %v459
      %v461 = vpop.f32.mrb[0].mxu0
      %v462 = vadd.f32 %v353, %v461
      %v463 = vpop.f32.mrb[0].mxu0
      %v464 = vadd.f32 %v357, %v463
      %465 = vmatprep.mubr.bf16.mxu0 0
      %466 = vmatmul.mubr.bf16.gmra.mrb[0].mxu0 %v401
      %v467 = vpop.f32.mrb[0].mxu0
      %v468 = vadd.f32 %v353, %v467
      %v469 = vpop.f32.mrb[0].mxu0
      %v470 = vadd.f32 %v357, %v469
      %v471 = vpop.f32.mrb[0].mxu0
      %v472 = vadd.f32 %v353, %v471
      %v473 = vpop.f32.mrb[0].mxu0
      %v474 = vadd.f32 %v357, %v473
      %475 = vdwg.mxu0
      %476 = vst [vmem:[#allocation4] sm:$0xff] %v438
      %vm477 = vcmask 523264
      %478 = vst.msk [vmem:[#allocation4 + $0x8] sm:$0xff] %vm477, %v440
      %479 = vst [vmem:[#allocation4 + $0x10] sm:$0xff] %v442
      %480 = vst.msk [vmem:[#allocation4 + $0x18] sm:$0xff] %vm477, %v444
      %481 = vst [vmem:[#allocation4 + $0x20] sm:$0xff] %v448
      %482 = vst.msk [vmem:[#allocation4 + $0x28] sm:$0xff] %vm477, %v450
      %483 = vst [vmem:[#allocation4 + $0x30] sm:$0xff] %v452
      %484 = vst.msk [vmem:[#allocation4 + $0x38] sm:$0xff] %vm477, %v454
      %485 = vst [vmem:[#allocation4 + $0x40] sm:$0xff] %v458
      %486 = vst.msk [vmem:[#allocation4 + $0x48] sm:$0xff] %vm477, %v460
      %487 = vst [vmem:[#allocation4 + $0x50] sm:$0xff] %v462
      %488 = vst.msk [vmem:[#allocation4 + $0x58] sm:$0xff] %vm477, %v464
      %489 = vst [vmem:[#allocation4 + $0x60] sm:$0xff] %v468
      %490 = vst.msk [vmem:[#allocation4 + $0x68] sm:$0xff] %vm477, %v470
      %491 = vst [vmem:[#allocation4 + $0x70] sm:$0xff] %v472
      %492 = vst.msk [vmem:[#allocation4 + $0x78] sm:$0xff] %vm477, %v474
      %v493 = vld [vmem:[#allocation2] sm:$0xff]
      %v494 = vld [vmem:[#allocation3] sm:$0xff]
      %s495 = smul.u32 %s20, 7
      %s496 = smul.u32 %s495, 2
      %s497 = smul.addr %s496, 8
      %s498 = scalar_lea.vmem [#allocation4], %s497
      %v499 = vld [vmem:[%s498] sm:$0xff]
      %v500 = vld [vmem:[%s498 + $0x8] sm:$0xff]
      %v501 = vld [vmem:[%s3] sm:$0xff]
      %v502 = vld [vmem:[%s3 + $0x8] sm:$0xff]
      %v503 = vld [vmem:[%s3 + $0x10] sm:$0xff]
      %v504 = vld [vmem:[%s3 + $0x18] sm:$0xff]
      %v505 = vld [vmem:[%s3 + $0x20] sm:$0xff]
      %v506 = vld [vmem:[%s3 + $0x28] sm:$0xff]
      %v507 = vld [vmem:[%s3 + $0x30] sm:$0xff]
      %v508 = vld [vmem:[%s3 + $0x38] sm:$0xff]
      %v509 = vld [vmem:[%s3 + $0x40] sm:$0xff]
      %v510 = vld [vmem:[%s3 + $0x48] sm:$0xff]
      %v511 = vld [vmem:[%s3 + $0x50] sm:$0xff]
      %v512 = vld [vmem:[%s3 + $0x58] sm:$0xff]
      %v513 = vld [vmem:[%s3 + $0x60] sm:$0xff]
      %v514 = vld [vmem:[%s3 + $0x68] sm:$0xff]
      %v515 = vld [vmem:[%s3 + $0x70] sm:$0xff]
      %v516 = vld [vmem:[%s3 + $0x78] sm:$0xff]
      %v517 = vld [vmem:[%s3 + $0x80] sm:$0xff]
      %v518 = vld [vmem:[%s3 + $0x88] sm:$0xff]
      %v519 = vld [vmem:[%s3 + $0x90] sm:$0xff]
      %v520 = vld [vmem:[%s3 + $0x98] sm:$0xff]
      %v521 = vld [vmem:[%s3 + $0xa0] sm:$0xff]
      %v522 = vld [vmem:[%s3 + $0xa8] sm:$0xff]
      %v523 = vld [vmem:[%s3 + $0xb0] sm:$0xff]
      %v524 = vld [vmem:[%s3 + $0xb8] sm:$0xff]
      %vm525 = vcmask 785408
      %v527 = vsel %vm525, %v493, 0
      %529 = vmatprep.subr.mxu0 %v502
      %530 = vmatpush1.msra.mxu0 %v501
      %531 = vmatprep.subr.mxu0 %v504
      %532 = vmatpush1.msra.mxu0 %v503
      %533 = vmatprep.subr.mxu0 %v506
      %534 = vmatpush1.msra.mxu0 %v505
      %535 = vmatprep.subr.mxu0 %v508
      %536 = vmatpush1.msra.mxu0 %v507
      %537 = vmatprep.subr.mxu0 %v510
      %538 = vmatpush1.msra.mxu0 %v509
      %539 = vmatprep.subr.mxu0 %v512
      %540 = vmatpush1.msra.mxu0 %v511
      %541 = vmatprep.subr.mxu0 %v514
      %542 = vmatpush1.msra.mxu0 %v513
      %543 = vmatprep.subr.mxu0 %v516
      %544 = vmatpush1.msra.mxu0 %v515
      %545 = vmatprep.subr.mxu0 %v518
      %546 = vmatpush1.msra.mxu0 %v517
      %547 = vmatprep.subr.mxu0 %v520
      %548 = vmatpush1.msra.mxu0 %v519
      %549 = vmatprep.subr.mxu0 %v522
      %550 = vmatpush1.msra.mxu0 %v521
      %551 = vmatprep.subr.mxu0 %v524
      %552 = vmatpush1.msra.mxu0 %v523
      %553 = vmatprep.subr.mxu0 0.0
      %554 = vmatpush1.msra.mxu0 0.0
      %555 = vmatprep.subr.mxu0 0.0
      %556 = vmatpush1.msra.mxu0 0.0
      %557 = vmatprep.subr.mxu0 0.0
      %558 = vmatpush1.msra.mxu0 0.0
      %559 = vmatprep.subr.mxu0 0.0
      %560 = vmatpush1.msra.mxu0 0.0
      %561 = vmatprep.subr.mxu0 0.0
      %562 = vmatpush1.msra.mxu0 0.0
      %563 = vmatprep.subr.mxu0 0.0
      %564 = vmatpush1.msra.mxu0 0.0
      %565 = vmatprep.subr.mxu0 0.0
      %566 = vmatpush1.msra.mxu0 0.0
      %567 = vmatprep.subr.mxu0 0.0
      %568 = vmatpush1.msra.mxu0 0.0
      %569 = vmatprep.subr.mxu0 0.0
      %570 = vmatpush1.msra.mxu0 0.0
      %571 = vmatprep.subr.mxu0 0.0
      %572 = vmatpush1.msra.mxu0 0.0
      %573 = vmatprep.subr.mxu0 0.0
      %574 = vmatpush1.msra.mxu0 0.0
      %575 = vmatprep.subr.mxu0 0.0
      %576 = vmatpush1.msra.mxu0 0.0
      %577 = vmatprep.subr.mxu0 0.0
      %578 = vmatpush1.msra.mxu0 0.0
      %579 = vmatprep.subr.mxu0 0.0
      %580 = vmatpush1.msra.mxu0 0.0
      %581 = vmatprep.subr.mxu0 0.0
      %582 = vmatpush1.msra.mxu0 0.0
      %583 = vmatprep.subr.mxu0 0.0
      %584 = vmatpush1.msra.mxu0 0.0
      %585 = vmatprep.subr.mxu0 0.0
      %586 = vmatpush1.msra.mxu0 0.0
      %587 = vmatprep.subr.mxu0 0.0
      %588 = vmatpush1.msra.mxu0 0.0
      %589 = vmatprep.subr.mxu0 0.0
      %590 = vmatpush1.msra.mxu0 0.0
      %591 = vmatprep.subr.mxu0 0.0
      %592 = vmatpush1.msra.mxu0 0.0
      %593 = vmatprep.mubr.f32.mxu0 0.0
      %594 = vmatmul.mubr.f32.gmra.mrb[0].mxu0 %v527
      %v595 = vpop.f32.mrb[0].mxu0
      %v596 = vadd.f32 0.0, %v595
      %v597 = vpop.f32.mrb[0].mxu0
      %v598 = vadd.f32 0.0, %v597
      %599 = vdwg.mxu0
      %v600 = vadd.f32 %v499, %v596
      %v601 = vadd.f32 %v500, %v598
      %s602 = smul.u32 %s495, 8
      %s603 = scalar_lea.vmem %s308, %s602
      %v604 = vld [vmem:[%s603] sm:$0xff]
      %v605 = vxor.u32 %v600, 2147483648
      %v606 = vmul.f32 %v605, 1.442695
      %v607 = vpow.pop %v606
      %v608 = vadd.f32 %v607, 1.0
      %v609 = vrcp.pop %v608
      %v610 = vmul.f32 1.0, %v609
      %v611 = vtanh.pop %v600
      %v612 = vtanh.pop %v601
      %614 = vrot.lane.b32.xlu0 %v494, 32
      %v615 = vpop.permute.xlu0 %614
      %v617 = vmul.f32 %v610, %v615
      %619 = vrot.lane.b32.xlu0 %v611, 64
      %v620 = vpop.permute.xlu0 %619
      %v622 = vmul.f32 %v610, %v620
      %624 = vrot.lane.b32.xlu0 %v622, 32
      %v625 = vpop.permute.xlu0 %624
      %v627 = vadd.f32 %v617, %v625
      %v628 = vtanh.pop %v627
      %630 = vrot.lane.b32.xlu0 %v628, 64
      %v631 = vpop.permute.xlu0 %630
      %v633 = vmul.f32 %v610, %v631
      %634 = vrot.lane.b32.xlu0 %v493, 96
      %v635 = vpop.permute.xlu0 %634
      %v637 = vsub.f32 %v633, %v635
      %639 = vset.pattern.permute.xlu0 0
      %640 = vperm.xlu0 %639, %v604
      %v641 = vpop.permute.xlu0 %640
      %v643 = vmul.f32 %v641, %v637
      %645 = vrot.lane.b32.xlu0 %v643, 32
      %v646 = vpop.permute.xlu0 %645
      %v648 = vadd.f32 %v493, %v646
      %v649 = vsub.f32 %v627, %v615
      %v650 = vmul.f32 %v641, %v649
      %652 = vrot.lane.b32.xlu0 %v650, 96
      %v653 = vpop.permute.xlu0 %652
      %v655 = vadd.f32 %v494, %v653
      %v656 = vsub.f32 %v612, %v635
      %v657 = vmul.f32 %v641, %v656
      %659 = vrot.lane.b32.xlu0 %v657, 32
      %v660 = vpop.permute.xlu0 %659
      %v662 = vadd.f32 %v493, %v660
      %vm663 = vcmask 261120
      %v664 = vsel %vm663, %v648, %v662
      %666 = vrot.lane.b32.xlu0 %v655, 96
      %v667 = vpop.permute.xlu0 %666
      %v669 = vsel %vm525, %v664, %v667
      %s670 = scalar_lea.vmem %s324, %s602
      %671 = vst [vmem:[%s670] sm:$0xff] %v669
      %s672 = smul.u32 %s20, 2
      %s673 = ssub.s32 1, %s672
      %s674 = sadd.s32 %s495, %s673
      %s675 = smul.u32 %s674, 2
      %s676 = smul.addr %s675, 8
      %s677 = scalar_lea.vmem [#allocation4], %s676
      %v678 = vld [vmem:[%s677] sm:$0xff]
      %v679 = vld [vmem:[%s677 + $0x8] sm:$0xff]
      %v680 = vld [vmem:[%s3] sm:$0xff]
      %v681 = vld [vmem:[%s3 + $0x8] sm:$0xff]
      %v682 = vld [vmem:[%s3 + $0x10] sm:$0xff]
      %v683 = vld [vmem:[%s3 + $0x18] sm:$0xff]
      %v684 = vld [vmem:[%s3 + $0x20] sm:$0xff]
      %v685 = vld [vmem:[%s3 + $0x28] sm:$0xff]
      %v686 = vld [vmem:[%s3 + $0x30] sm:$0xff]
      %v687 = vld [vmem:[%s3 + $0x38] sm:$0xff]
      %v688 = vld [vmem:[%s3 + $0x40] sm:$0xff]
      %v689 = vld [vmem:[%s3 + $0x48] sm:$0xff]
      %v690 = vld [vmem:[%s3 + $0x50] sm:$0xff]
      %v691 = vld [vmem:[%s3 + $0x58] sm:$0xff]
      %v692 = vld [vmem:[%s3 + $0x60] sm:$0xff]
      %v693 = vld [vmem:[%s3 + $0x68] sm:$0xff]
      %v694 = vld [vmem:[%s3 + $0x70] sm:$0xff]
      %v695 = vld [vmem:[%s3 + $0x78] sm:$0xff]
      %v696 = vld [vmem:[%s3 + $0x80] sm:$0xff]
      %v697 = vld [vmem:[%s3 + $0x88] sm:$0xff]
      %v698 = vld [vmem:[%s3 + $0x90] sm:$0xff]
      %v699 = vld [vmem:[%s3 + $0x98] sm:$0xff]
      %v700 = vld [vmem:[%s3 + $0xa0] sm:$0xff]
      %v701 = vld [vmem:[%s3 + $0xa8] sm:$0xff]
      %v702 = vld [vmem:[%s3 + $0xb0] sm:$0xff]
      %v703 = vld [vmem:[%s3 + $0xb8] sm:$0xff]
      %v705 = vsel %vm525, %v664, 0
      %707 = vmatprep.subr.mxu0 %v681
      %708 = vmatpush1.msra.mxu0 %v680
      %709 = vmatprep.subr.mxu0 %v683
      %710 = vmatpush1.msra.mxu0 %v682
      %711 = vmatprep.subr.mxu0 %v685
      %712 = vmatpush1.msra.mxu0 %v684
      %713 = vmatprep.subr.mxu0 %v687
      %714 = vmatpush1.msra.mxu0 %v686
      %715 = vmatprep.subr.mxu0 %v689
      %716 = vmatpush1.msra.mxu0 %v688
      %717 = vmatprep.subr.mxu0 %v691
      %718 = vmatpush1.msra.mxu0 %v690
      %719 = vmatprep.subr.mxu0 %v693
      %720 = vmatpush1.msra.mxu0 %v692
      %721 = vmatprep.subr.mxu0 %v695
      %722 = vmatpush1.msra.mxu0 %v694
      %723 = vmatprep.subr.mxu0 %v697
      %724 = vmatpush1.msra.mxu0 %v696
      %725 = vmatprep.subr.mxu0 %v699
      %726 = vmatpush1.msra.mxu0 %v698
      %727 = vmatprep.subr.mxu0 %v701
      %728 = vmatpush1.msra.mxu0 %v700
      %729 = vmatprep.subr.mxu0 %v703
      %730 = vmatpush1.msra.mxu0 %v702
      %731 = vmatprep.subr.mxu0 0.0
      %732 = vmatpush1.msra.mxu0 0.0
      %733 = vmatprep.subr.mxu0 0.0
      %734 = vmatpush1.msra.mxu0 0.0
      %735 = vmatprep.subr.mxu0 0.0
      %736 = vmatpush1.msra.mxu0 0.0
      %737 = vmatprep.subr.mxu0 0.0
      %738 = vmatpush1.msra.mxu0 0.0
      %739 = vmatprep.subr.mxu0 0.0
      %740 = vmatpush1.msra.mxu0 0.0
      %741 = vmatprep.subr.mxu0 0.0
      %742 = vmatpush1.msra.mxu0 0.0
      %743 = vmatprep.subr.mxu0 0.0
      %744 = vmatpush1.msra.mxu0 0.0
      %745 = vmatprep.subr.mxu0 0.0
      %746 = vmatpush1.msra.mxu0 0.0
      %747 = vmatprep.subr.mxu0 0.0
      %748 = vmatpush1.msra.mxu0 0.0
      %749 = vmatprep.subr.mxu0 0.0
      %750 = vmatpush1.msra.mxu0 0.0
      %751 = vmatprep.subr.mxu0 0.0
      %752 = vmatpush1.msra.mxu0 0.0
      %753 = vmatprep.subr.mxu0 0.0
      %754 = vmatpush1.msra.mxu0 0.0
      %755 = vmatprep.subr.mxu0 0.0
      %756 = vmatpush1.msra.mxu0 0.0
      %757 = vmatprep.subr.mxu0 0.0
      %758 = vmatpush1.msra.mxu0 0.0
      %759 = vmatprep.subr.mxu0 0.0
      %760 = vmatpush1.msra.mxu0 0.0
      %761 = vmatprep.subr.mxu0 0.0
      %762 = vmatpush1.msra.mxu0 0.0
      %763 = vmatprep.subr.mxu0 0.0
      %764 = vmatpush1.msra.mxu0 0.0
      %765 = vmatprep.subr.mxu0 0.0
      %766 = vmatpush1.msra.mxu0 0.0
      %767 = vmatprep.subr.mxu0 0.0
      %768 = vmatpush1.msra.mxu0 0.0
      %769 = vmatprep.subr.mxu0 0.0
      %770 = vmatpush1.msra.mxu0 0.0
      %771 = vmatprep.mubr.f32.mxu0 0.0
      %772 = vmatmul.mubr.f32.gmra.mrb[0].mxu0 %v705
      %v773 = vpop.f32.mrb[0].mxu0
      %v774 = vadd.f32 0.0, %v773
      %v775 = vpop.f32.mrb[0].mxu0
      %v776 = vadd.f32 0.0, %v775
      %777 = vdwg.mxu0
      %v778 = vadd.f32 %v678, %v774
      %v779 = vadd.f32 %v679, %v776
      %s780 = smul.u32 %s674, 8
      %s781 = scalar_lea.vmem %s308, %s780
      %v782 = vld [vmem:[%s781] sm:$0xff]
      %v783 = vxor.u32 %v778, 2147483648
      %v784 = vmul.f32 %v783, 1.442695
      %v785 = vpow.pop %v784
      %v786 = vadd.f32 %v785, 1.0
      %v787 = vrcp.pop %v786
      %v788 = vmul.f32 1.0, %v787
      %v789 = vtanh.pop %v778
      %v790 = vtanh.pop %v779
      %791 = vrot.lane.b32.xlu0 %v655, 32
      %v792 = vpop.permute.xlu0 %791
      %v794 = vmul.f32 %v788, %v792
      %796 = vrot.lane.b32.xlu0 %v789, 64
      %v797 = vpop.permute.xlu0 %796
      %v799 = vmul.f32 %v788, %v797
      %801 = vrot.lane.b32.xlu0 %v799, 32
      %v802 = vpop.permute.xlu0 %801
      %v804 = vadd.f32 %v794, %v802
      %v805 = vtanh.pop %v804
      %807 = vrot.lane.b32.xlu0 %v805, 64
      %v808 = vpop.permute.xlu0 %807
      %v810 = vmul.f32 %v788, %v808
      %811 = vrot.lane.b32.xlu0 %v664, 96
      %v812 = vpop.permute.xlu0 %811
      %v814 = vsub.f32 %v810, %v812
      %816 = vset.pattern.permute.xlu0 0
      %817 = vperm.xlu0 %816, %v782
      %v818 = vpop.permute.xlu0 %817
      %v820 = vmul.f32 %v818, %v814
      %822 = vrot.lane.b32.xlu0 %v820, 32
      %v823 = vpop.permute.xlu0 %822
      %v825 = vadd.f32 %v664, %v823
      %v826 = vsub.f32 %v804, %v792
      %v827 = vmul.f32 %v818, %v826
      %829 = vrot.lane.b32.xlu0 %v827, 96
      %v830 = vpop.permute.xlu0 %829
      %v832 = vadd.f32 %v655, %v830
      %v833 = vsub.f32 %v790, %v812
      %v834 = vmul.f32 %v818, %v833
      %836 = vrot.lane.b32.xlu0 %v834, 32
      %v837 = vpop.permute.xlu0 %836
      %v839 = vadd.f32 %v664, %v837
      %v840 = vsel %vm663, %v825, %v839
      %842 = vrot.lane.b32.xlu0 %v832, 96
      %v843 = vpop.permute.xlu0 %842
      %v845 = vsel %vm525, %v840, %v843
      %s846 = scalar_lea.vmem %s324, %s780
      %847 = vst [vmem:[%s846] sm:$0xff] %v845
      %s848 = smul.u32 %s673, 2
      %s849 = sadd.s32 %s495, %s848
      %s850 = smul.u32 %s849, 2
      %s851 = smul.addr %s850, 8
      %s852 = scalar_lea.vmem [#allocation4], %s851
      %v853 = vld [vmem:[%s852] sm:$0xff]
      %v854 = vld [vmem:[%s852 + $0x8] sm:$0xff]
      %v855 = vld [vmem:[%s3] sm:$0xff]
      %v856 = vld [vmem:[%s3 + $0x8] sm:$0xff]
      %v857 = vld [vmem:[%s3 + $0x10] sm:$0xff]
      %v858 = vld [vmem:[%s3 + $0x18] sm:$0xff]
      %v859 = vld [vmem:[%s3 + $0x20] sm:$0xff]
      %v860 = vld [vmem:[%s3 + $0x28] sm:$0xff]
      %v861 = vld [vmem:[%s3 + $0x30] sm:$0xff]
      %v862 = vld [vmem:[%s3 + $0x38] sm:$0xff]
      %v863 = vld [vmem:[%s3 + $0x40] sm:$0xff]
      %v864 = vld [vmem:[%s3 + $0x48] sm:$0xff]
      %v865 = vld [vmem:[%s3 + $0x50] sm:$0xff]
      %v866 = vld [vmem:[%s3 + $0x58] sm:$0xff]
      %v867 = vld [vmem:[%s3 + $0x60] sm:$0xff]
      %v868 = vld [vmem:[%s3 + $0x68] sm:$0xff]
      %v869 = vld [vmem:[%s3 + $0x70] sm:$0xff]
      %v870 = vld [vmem:[%s3 + $0x78] sm:$0xff]
      %v871 = vld [vmem:[%s3 + $0x80] sm:$0xff]
      %v872 = vld [vmem:[%s3 + $0x88] sm:$0xff]
      %v873 = vld [vmem:[%s3 + $0x90] sm:$0xff]
      %v874 = vld [vmem:[%s3 + $0x98] sm:$0xff]
      %v875 = vld [vmem:[%s3 + $0xa0] sm:$0xff]
      %v876 = vld [vmem:[%s3 + $0xa8] sm:$0xff]
      %v877 = vld [vmem:[%s3 + $0xb0] sm:$0xff]
      %v878 = vld [vmem:[%s3 + $0xb8] sm:$0xff]
      %v880 = vsel %vm525, %v840, 0
      %882 = vmatprep.subr.mxu0 %v856
      %883 = vmatpush1.msra.mxu0 %v855
      %884 = vmatprep.subr.mxu0 %v858
      %885 = vmatpush1.msra.mxu0 %v857
      %886 = vmatprep.subr.mxu0 %v860
      %887 = vmatpush1.msra.mxu0 %v859
      %888 = vmatprep.subr.mxu0 %v862
      %889 = vmatpush1.msra.mxu0 %v861
      %890 = vmatprep.subr.mxu0 %v864
      %891 = vmatpush1.msra.mxu0 %v863
      %892 = vmatprep.subr.mxu0 %v866
      %893 = vmatpush1.msra.mxu0 %v865
      %894 = vmatprep.subr.mxu0 %v868
      %895 = vmatpush1.msra.mxu0 %v867
      %896 = vmatprep.subr.mxu0 %v870
      %897 = vmatpush1.msra.mxu0 %v869
      %898 = vmatprep.subr.mxu0 %v872
      %899 = vmatpush1.msra.mxu0 %v871
      %900 = vmatprep.subr.mxu0 %v874
      %901 = vmatpush1.msra.mxu0 %v873
      %902 = vmatprep.subr.mxu0 %v876
      %903 = vmatpush1.msra.mxu0 %v875
      %904 = vmatprep.subr.mxu0 %v878
      %905 = vmatpush1.msra.mxu0 %v877
      %906 = vmatprep.subr.mxu0 0.0
      %907 = vmatpush1.msra.mxu0 0.0
      %908 = vmatprep.subr.mxu0 0.0
      %909 = vmatpush1.msra.mxu0 0.0
      %910 = vmatprep.subr.mxu0 0.0
      %911 = vmatpush1.msra.mxu0 0.0
      %912 = vmatprep.subr.mxu0 0.0
      %913 = vmatpush1.msra.mxu0 0.0
      %914 = vmatprep.subr.mxu0 0.0
      %915 = vmatpush1.msra.mxu0 0.0
      %916 = vmatprep.subr.mxu0 0.0
      %917 = vmatpush1.msra.mxu0 0.0
      %918 = vmatprep.subr.mxu0 0.0
      %919 = vmatpush1.msra.mxu0 0.0
      %920 = vmatprep.subr.mxu0 0.0
      %921 = vmatpush1.msra.mxu0 0.0
      %922 = vmatprep.subr.mxu0 0.0
      %923 = vmatpush1.msra.mxu0 0.0
      %924 = vmatprep.subr.mxu0 0.0
      %925 = vmatpush1.msra.mxu0 0.0
      %926 = vmatprep.subr.mxu0 0.0
      %927 = vmatpush1.msra.mxu0 0.0
      %928 = vmatprep.subr.mxu0 0.0
      %929 = vmatpush1.msra.mxu0 0.0
      %930 = vmatprep.subr.mxu0 0.0
      %931 = vmatpush1.msra.mxu0 0.0
      %932 = vmatprep.subr.mxu0 0.0
      %933 = vmatpush1.msra.mxu0 0.0
      %934 = vmatprep.subr.mxu0 0.0
      %935 = vmatpush1.msra.mxu0 0.0
      %936 = vmatprep.subr.mxu0 0.0
      %937 = vmatpush1.msra.mxu0 0.0
      %938 = vmatprep.subr.mxu0 0.0
      %939 = vmatpush1.msra.mxu0 0.0
      %940 = vmatprep.subr.mxu0 0.0
      %941 = vmatpush1.msra.mxu0 0.0
      %942 = vmatprep.subr.mxu0 0.0
      %943 = vmatpush1.msra.mxu0 0.0
      %944 = vmatprep.subr.mxu0 0.0
      %945 = vmatpush1.msra.mxu0 0.0
      %946 = vmatprep.mubr.f32.mxu0 0.0
      %947 = vmatmul.mubr.f32.gmra.mrb[0].mxu0 %v880
      %v948 = vpop.f32.mrb[0].mxu0
      %v949 = vadd.f32 0.0, %v948
      %v950 = vpop.f32.mrb[0].mxu0
      %v951 = vadd.f32 0.0, %v950
      %952 = vdwg.mxu0
      %v953 = vadd.f32 %v853, %v949
      %v954 = vadd.f32 %v854, %v951
      %s955 = smul.u32 %s849, 8
      %s956 = scalar_lea.vmem %s308, %s955
      %v957 = vld [vmem:[%s956] sm:$0xff]
      %v958 = vxor.u32 %v953, 2147483648
      %v959 = vmul.f32 %v958, 1.442695
      %v960 = vpow.pop %v959
      %v961 = vadd.f32 %v960, 1.0
      %v962 = vrcp.pop %v961
      %v963 = vmul.f32 1.0, %v962
      %v964 = vtanh.pop %v953
      %v965 = vtanh.pop %v954
      %966 = vrot.lane.b32.xlu0 %v832, 32
      %v967 = vpop.permute.xlu0 %966
      %v969 = vmul.f32 %v963, %v967
      %971 = vrot.lane.b32.xlu0 %v964, 64
      %v972 = vpop.permute.xlu0 %971
      %v974 = vmul.f32 %v963, %v972
      %976 = vrot.lane.b32.xlu0 %v974, 32
      %v977 = vpop.permute.xlu0 %976
      %v979 = vadd.f32 %v969, %v977
      %v980 = vtanh.pop %v979
      %982 = vrot.lane.b32.xlu0 %v980, 64
      %v983 = vpop.permute.xlu0 %982
      %v985 = vmul.f32 %v963, %v983
      %986 = vrot.lane.b32.xlu0 %v840, 96
      %v987 = vpop.permute.xlu0 %986
      %v989 = vsub.f32 %v985, %v987
      %991 = vset.pattern.permute.xlu0 0
      %992 = vperm.xlu0 %991, %v957
      %v993 = vpop.permute.xlu0 %992
      %v995 = vmul.f32 %v993, %v989
      %997 = vrot.lane.b32.xlu0 %v995, 32
      %v998 = vpop.permute.xlu0 %997
      %v1000 = vadd.f32 %v840, %v998
      %v1001 = vsub.f32 %v979, %v967
      %v1002 = vmul.f32 %v993, %v1001
      %1004 = vrot.lane.b32.xlu0 %v1002, 96
      %v1005 = vpop.permute.xlu0 %1004
      %v1007 = vadd.f32 %v832, %v1005
      %v1008 = vsub.f32 %v965, %v987
      %v1009 = vmul.f32 %v993, %v1008
      %1011 = vrot.lane.b32.xlu0 %v1009, 32
      %v1012 = vpop.permute.xlu0 %1011
      %v1014 = vadd.f32 %v840, %v1012
      %v1015 = vsel %vm663, %v1000, %v1014
      %1017 = vrot.lane.b32.xlu0 %v1007, 96
      %v1018 = vpop.permute.xlu0 %1017
      %v1020 = vsel %vm525, %v1015, %v1018
      %s1021 = scalar_lea.vmem %s324, %s955
      %1022 = vst [vmem:[%s1021] sm:$0xff] %v1020
      %s1023 = smul.u32 %s673, 3
      %s1024 = sadd.s32 %s495, %s1023
      %s1025 = smul.u32 %s1024, 2
      %s1026 = smul.addr %s1025, 8
      %s1027 = scalar_lea.vmem [#allocation4], %s1026
      %v1028 = vld [vmem:[%s1027] sm:$0xff]
      %v1029 = vld [vmem:[%s1027 + $0x8] sm:$0xff]
      %v1030 = vld [vmem:[%s3] sm:$0xff]
      %v1031 = vld [vmem:[%s3 + $0x8] sm:$0xff]
      %v1032 = vld [vmem:[%s3 + $0x10] sm:$0xff]
      %v1033 = vld [vmem:[%s3 + $0x18] sm:$0xff]
      %v1034 = vld [vmem:[%s3 + $0x20] sm:$0xff]
      %v1035 = vld [vmem:[%s3 + $0x28] sm:$0xff]
      %v1036 = vld [vmem:[%s3 + $0x30] sm:$0xff]
      %v1037 = vld [vmem:[%s3 + $0x38] sm:$0xff]
      %v1038 = vld [vmem:[%s3 + $0x40] sm:$0xff]
      %v1039 = vld [vmem:[%s3 + $0x48] sm:$0xff]
      %v1040 = vld [vmem:[%s3 + $0x50] sm:$0xff]
      %v1041 = vld [vmem:[%s3 + $0x58] sm:$0xff]
      %v1042 = vld [vmem:[%s3 + $0x60] sm:$0xff]
      %v1043 = vld [vmem:[%s3 + $0x68] sm:$0xff]
      %v1044 = vld [vmem:[%s3 + $0x70] sm:$0xff]
      %v1045 = vld [vmem:[%s3 + $0x78] sm:$0xff]
      %v1046 = vld [vmem:[%s3 + $0x80] sm:$0xff]
      %v1047 = vld [vmem:[%s3 + $0x88] sm:$0xff]
      %v1048 = vld [vmem:[%s3 + $0x90] sm:$0xff]
      %v1049 = vld [vmem:[%s3 + $0x98] sm:$0xff]
      %v1050 = vld [vmem:[%s3 + $0xa0] sm:$0xff]
      %v1051 = vld [vmem:[%s3 + $0xa8] sm:$0xff]
      %v1052 = vld [vmem:[%s3 + $0xb0] sm:$0xff]
      %v1053 = vld [vmem:[%s3 + $0xb8] sm:$0xff]
      %v1055 = vsel %vm525, %v1015, 0
      %1057 = vmatprep.subr.mxu0 %v1031
      %1058 = vmatpush1.msra.mxu0 %v1030
      %1059 = vmatprep.subr.mxu0 %v1033
      %1060 = vmatpush1.msra.mxu0 %v1032
      %1061 = vmatprep.subr.mxu0 %v1035
      %1062 = vmatpush1.msra.mxu0 %v1034
      %1063 = vmatprep.subr.mxu0 %v1037
      %1064 = vmatpush1.msra.mxu0 %v1036
      %1065 = vmatprep.subr.mxu0 %v1039
      %1066 = vmatpush1.msra.mxu0 %v1038
      %1067 = vmatprep.subr.mxu0 %v1041
      %1068 = vmatpush1.msra.mxu0 %v1040
      %1069 = vmatprep.subr.mxu0 %v1043
      %1070 = vmatpush1.msra.mxu0 %v1042
      %1071 = vmatprep.subr.mxu0 %v1045
      %1072 = vmatpush1.msra.mxu0 %v1044
      %1073 = vmatprep.subr.mxu0 %v1047
      %1074 = vmatpush1.msra.mxu0 %v1046
      %1075 = vmatprep.subr.mxu0 %v1049
      %1076 = vmatpush1.msra.mxu0 %v1048
      %1077 = vmatprep.subr.mxu0 %v1051
      %1078 = vmatpush1.msra.mxu0 %v1050
      %1079 = vmatprep.subr.mxu0 %v1053
      %1080 = vmatpush1.msra.mxu0 %v1052
      %1081 = vmatprep.subr.mxu0 0.0
      %1082 = vmatpush1.msra.mxu0 0.0
      %1083 = vmatprep.subr.mxu0 0.0
      %1084 = vmatpush1.msra.mxu0 0.0
      %1085 = vmatprep.subr.mxu0 0.0
      %1086 = vmatpush1.msra.mxu0 0.0
      %1087 = vmatprep.subr.mxu0 0.0
      %1088 = vmatpush1.msra.mxu0 0.0
      %1089 = vmatprep.subr.mxu0 0.0
      %1090 = vmatpush1.msra.mxu0 0.0
      %1091 = vmatprep.subr.mxu0 0.0
      %1092 = vmatpush1.msra.mxu0 0.0
      %1093 = vmatprep.subr.mxu0 0.0
      %1094 = vmatpush1.msra.mxu0 0.0
      %1095 = vmatprep.subr.mxu0 0.0
      %1096 = vmatpush1.msra.mxu0 0.0
      %1097 = vmatprep.subr.mxu0 0.0
      %1098 = vmatpush1.msra.mxu0 0.0
      %1099 = vmatprep.subr.mxu0 0.0
      %1100 = vmatpush1.msra.mxu0 0.0
      %1101 = vmatprep.subr.mxu0 0.0
      %1102 = vmatpush1.msra.mxu0 0.0
      %1103 = vmatprep.subr.mxu0 0.0
      %1104 = vmatpush1.msra.mxu0 0.0
      %1105 = vmatprep.subr.mxu0 0.0
      %1106 = vmatpush1.msra.mxu0 0.0
      %1107 = vmatprep.subr.mxu0 0.0
      %1108 = vmatpush1.msra.mxu0 0.0
      %1109 = vmatprep.subr.mxu0 0.0
      %1110 = vmatpush1.msra.mxu0 0.0
      %1111 = vmatprep.subr.mxu0 0.0
      %1112 = vmatpush1.msra.mxu0 0.0
      %1113 = vmatprep.subr.mxu0 0.0
      %1114 = vmatpush1.msra.mxu0 0.0
      %1115 = vmatprep.subr.mxu0 0.0
      %1116 = vmatpush1.msra.mxu0 0.0
      %1117 = vmatprep.subr.mxu0 0.0
      %1118 = vmatpush1.msra.mxu0 0.0
      %1119 = vmatprep.subr.mxu0 0.0
      %1120 = vmatpush1.msra.mxu0 0.0
      %1121 = vmatprep.mubr.f32.mxu0 0.0
      %1122 = vmatmul.mubr.f32.gmra.mrb[0].mxu0 %v1055
      %v1123 = vpop.f32.mrb[0].mxu0
      %v1124 = vadd.f32 0.0, %v1123
      %v1125 = vpop.f32.mrb[0].mxu0
      %v1126 = vadd.f32 0.0, %v1125
      %1127 = vdwg.mxu0
      %v1128 = vadd.f32 %v1028, %v1124
      %v1129 = vadd.f32 %v1029, %v1126
      %s1130 = smul.u32 %s1024, 8
      %s1131 = scalar_lea.vmem %s308, %s1130
      %v1132 = vld [vmem:[%s1131] sm:$0xff]
      %v1133 = vxor.u32 %v1128, 2147483648
      %v1134 = vmul.f32 %v1133, 1.442695
      %v1135 = vpow.pop %v1134
      %v1136 = vadd.f32 %v1135, 1.0
      %v1137 = vrcp.pop %v1136
      %v1138 = vmul.f32 1.0, %v1137
      %v1139 = vtanh.pop %v1128
      %v1140 = vtanh.pop %v1129
      %1141 = vrot.lane.b32.xlu0 %v1007, 32
      %v1142 = vpop.permute.xlu0 %1141
      %v1144 = vmul.f32 %v1138, %v1142
      %1146 = vrot.lane.b32.xlu0 %v1139, 64
      %v1147 = vpop.permute.xlu0 %1146
      %v1149 = vmul.f32 %v1138, %v1147
      %1151 = vrot.lane.b32.xlu0 %v1149, 32
      %v1152 = vpop.permute.xlu0 %1151
      %v1154 = vadd.f32 %v1144, %v1152
      %v1155 = vtanh.pop %v1154
      %1157 = vrot.lane.b32.xlu0 %v1155, 64
      %v1158 = vpop.permute.xlu0 %1157
      %v1160 = vmul.f32 %v1138, %v1158
      %1161 = vrot.lane.b32.xlu0 %v1015, 96
      %v1162 = vpop.permute.xlu0 %1161
      %v1164 = vsub.f32 %v1160, %v1162
      %1166 = vset.pattern.permute.xlu0 0
      %1167 = vperm.xlu0 %1166, %v1132
      %v1168 = vpop.permute.xlu0 %1167
      %v1170 = vmul.f32 %v1168, %v1164
      %1172 = vrot.lane.b32.xlu0 %v1170, 32
      %v1173 = vpop.permute.xlu0 %1172
      %v1175 = vadd.f32 %v1015, %v1173
      %v1176 = vsub.f32 %v1154, %v1142
      %v1177 = vmul.f32 %v1168, %v1176
      %1179 = vrot.lane.b32.xlu0 %v1177, 96
      %v1180 = vpop.permute.xlu0 %1179
      %v1182 = vadd.f32 %v1007, %v1180
      %v1183 = vsub.f32 %v1140, %v1162
      %v1184 = vmul.f32 %v1168, %v1183
      %1186 = vrot.lane.b32.xlu0 %v1184, 32
      %v1187 = vpop.permute.xlu0 %1186
      %v1189 = vadd.f32 %v1015, %v1187
      %v1190 = vsel %vm663, %v1175, %v1189
      %1192 = vrot.lane.b32.xlu0 %v1182, 96
      %v1193 = vpop.permute.xlu0 %1192
      %v1195 = vsel %vm525, %v1190, %v1193
      %s1196 = scalar_lea.vmem %s324, %s1130
      %1197 = vst [vmem:[%s1196] sm:$0xff] %v1195
      %s1198 = smul.u32 %s673, 4
      %s1199 = sadd.s32 %s495, %s1198
      %s1200 = smul.u32 %s1199, 2
      %s1201 = smul.addr %s1200, 8
      %s1202 = scalar_lea.vmem [#allocation4], %s1201
      %v1203 = vld [vmem:[%s1202] sm:$0xff]
      %v1204 = vld [vmem:[%s1202 + $0x8] sm:$0xff]
      %v1205 = vld [vmem:[%s3] sm:$0xff]
      %v1206 = vld [vmem:[%s3 + $0x8] sm:$0xff]
      %v1207 = vld [vmem:[%s3 + $0x10] sm:$0xff]
      %v1208 = vld [vmem:[%s3 + $0x18] sm:$0xff]
      %v1209 = vld [vmem:[%s3 + $0x20] sm:$0xff]
      %v1210 = vld [vmem:[%s3 + $0x28] sm:$0xff]
      %v1211 = vld [vmem:[%s3 + $0x30] sm:$0xff]
      %v1212 = vld [vmem:[%s3 + $0x38] sm:$0xff]
      %v1213 = vld [vmem:[%s3 + $0x40] sm:$0xff]
      %v1214 = vld [vmem:[%s3 + $0x48] sm:$0xff]
      %v1215 = vld [vmem:[%s3 + $0x50] sm:$0xff]
      %v1216 = vld [vmem:[%s3 + $0x58] sm:$0xff]
      %v1217 = vld [vmem:[%s3 + $0x60] sm:$0xff]
      %v1218 = vld [vmem:[%s3 + $0x68] sm:$0xff]
      %v1219 = vld [vmem:[%s3 + $0x70] sm:$0xff]
      %v1220 = vld [vmem:[%s3 + $0x78] sm:$0xff]
      %v1221 = vld [vmem:[%s3 + $0x80] sm:$0xff]
      %v1222 = vld [vmem:[%s3 + $0x88] sm:$0xff]
      %v1223 = vld [vmem:[%s3 + $0x90] sm:$0xff]
      %v1224 = vld [vmem:[%s3 + $0x98] sm:$0xff]
      %v1225 = vld [vmem:[%s3 + $0xa0] sm:$0xff]
      %v1226 = vld [vmem:[%s3 + $0xa8] sm:$0xff]
      %v1227 = vld [vmem:[%s3 + $0xb0] sm:$0xff]
      %v1228 = vld [vmem:[%s3 + $0xb8] sm:$0xff]
      %v1230 = vsel %vm525, %v1190, 0
      %1232 = vmatprep.subr.mxu0 %v1206
      %1233 = vmatpush1.msra.mxu0 %v1205
      %1234 = vmatprep.subr.mxu0 %v1208
      %1235 = vmatpush1.msra.mxu0 %v1207
      %1236 = vmatprep.subr.mxu0 %v1210
      %1237 = vmatpush1.msra.mxu0 %v1209
      %1238 = vmatprep.subr.mxu0 %v1212
      %1239 = vmatpush1.msra.mxu0 %v1211
      %1240 = vmatprep.subr.mxu0 %v1214
      %1241 = vmatpush1.msra.mxu0 %v1213
      %1242 = vmatprep.subr.mxu0 %v1216
      %1243 = vmatpush1.msra.mxu0 %v1215
      %1244 = vmatprep.subr.mxu0 %v1218
      %1245 = vmatpush1.msra.mxu0 %v1217
      %1246 = vmatprep.subr.mxu0 %v1220
      %1247 = vmatpush1.msra.mxu0 %v1219
      %1248 = vmatprep.subr.mxu0 %v1222
      %1249 = vmatpush1.msra.mxu0 %v1221
      %1250 = vmatprep.subr.mxu0 %v1224
      %1251 = vmatpush1.msra.mxu0 %v1223
      %1252 = vmatprep.subr.mxu0 %v1226
      %1253 = vmatpush1.msra.mxu0 %v1225
      %1254 = vmatprep.subr.mxu0 %v1228
      %1255 = vmatpush1.msra.mxu0 %v1227
      %1256 = vmatprep.subr.mxu0 0.0
      %1257 = vmatpush1.msra.mxu0 0.0
      %1258 = vmatprep.subr.mxu0 0.0
      %1259 = vmatpush1.msra.mxu0 0.0
      %1260 = vmatprep.subr.mxu0 0.0
      %1261 = vmatpush1.msra.mxu0 0.0
      %1262 = vmatprep.subr.mxu0 0.0
      %1263 = vmatpush1.msra.mxu0 0.0
      %1264 = vmatprep.subr.mxu0 0.0
      %1265 = vmatpush1.msra.mxu0 0.0
      %1266 = vmatprep.subr.mxu0 0.0
      %1267 = vmatpush1.msra.mxu0 0.0
      %1268 = vmatprep.subr.mxu0 0.0
      %1269 = vmatpush1.msra.mxu0 0.0
      %1270 = vmatprep.subr.mxu0 0.0
      %1271 = vmatpush1.msra.mxu0 0.0
      %1272 = vmatprep.subr.mxu0 0.0
      %1273 = vmatpush1.msra.mxu0 0.0
      %1274 = vmatprep.subr.mxu0 0.0
      %1275 = vmatpush1.msra.mxu0 0.0
      %1276 = vmatprep.subr.mxu0 0.0
      %1277 = vmatpush1.msra.mxu0 0.0
      %1278 = vmatprep.subr.mxu0 0.0
      %1279 = vmatpush1.msra.mxu0 0.0
      %1280 = vmatprep.subr.mxu0 0.0
      %1281 = vmatpush1.msra.mxu0 0.0
      %1282 = vmatprep.subr.mxu0 0.0
      %1283 = vmatpush1.msra.mxu0 0.0
      %1284 = vmatprep.subr.mxu0 0.0
      %1285 = vmatpush1.msra.mxu0 0.0
      %1286 = vmatprep.subr.mxu0 0.0
      %1287 = vmatpush1.msra.mxu0 0.0
      %1288 = vmatprep.subr.mxu0 0.0
      %1289 = vmatpush1.msra.mxu0 0.0
      %1290 = vmatprep.subr.mxu0 0.0
      %1291 = vmatpush1.msra.mxu0 0.0
      %1292 = vmatprep.subr.mxu0 0.0
      %1293 = vmatpush1.msra.mxu0 0.0
      %1294 = vmatprep.subr.mxu0 0.0
      %1295 = vmatpush1.msra.mxu0 0.0
      %1296 = vmatprep.mubr.f32.mxu0 0.0
      %1297 = vmatmul.mubr.f32.gmra.mrb[0].mxu0 %v1230
      %v1298 = vpop.f32.mrb[0].mxu0
      %v1299 = vadd.f32 0.0, %v1298
      %v1300 = vpop.f32.mrb[0].mxu0
      %v1301 = vadd.f32 0.0, %v1300
      %1302 = vdwg.mxu0
      %v1303 = vadd.f32 %v1203, %v1299
      %v1304 = vadd.f32 %v1204, %v1301
      %s1305 = smul.u32 %s1199, 8
      %s1306 = scalar_lea.vmem %s308, %s1305
      %v1307 = vld [vmem:[%s1306] sm:$0xff]
      %v1308 = vxor.u32 %v1303, 2147483648
      %v1309 = vmul.f32 %v1308, 1.442695
      %v1310 = vpow.pop %v1309
      %v1311 = vadd.f32 %v1310, 1.0
      %v1312 = vrcp.pop %v1311
      %v1313 = vmul.f32 1.0, %v1312
      %v1314 = vtanh.pop %v1303
      %v1315 = vtanh.pop %v1304
      %1316 = vrot.lane.b32.xlu0 %v1182, 32
      %v1317 = vpop.permute.xlu0 %1316
      %v1319 = vmul.f32 %v1313, %v1317
      %1321 = vrot.lane.b32.xlu0 %v1314, 64
      %v1322 = vpop.permute.xlu0 %1321
      %v1324 = vmul.f32 %v1313, %v1322
      %1326 = vrot.lane.b32.xlu0 %v1324, 32
      %v1327 = vpop.permute.xlu0 %1326
      %v1329 = vadd.f32 %v1319, %v1327
      %v1330 = vtanh.pop %v1329
      %1332 = vrot.lane.b32.xlu0 %v1330, 64
      %v1333 = vpop.permute.xlu0 %1332
      %v1335 = vmul.f32 %v1313, %v1333
      %1336 = vrot.lane.b32.xlu0 %v1190, 96
      %v1337 = vpop.permute.xlu0 %1336
      %v1339 = vsub.f32 %v1335, %v1337
      %1341 = vset.pattern.permute.xlu0 0
      %1342 = vperm.xlu0 %1341, %v1307
      %v1343 = vpop.permute.xlu0 %1342
      %v1345 = vmul.f32 %v1343, %v1339
      %1347 = vrot.lane.b32.xlu0 %v1345, 32
      %v1348 = vpop.permute.xlu0 %1347
      %v1350 = vadd.f32 %v1190, %v1348
      %v1351 = vsub.f32 %v1329, %v1317
      %v1352 = vmul.f32 %v1343, %v1351
      %1354 = vrot.lane.b32.xlu0 %v1352, 96
      %v1355 = vpop.permute.xlu0 %1354
      %v1357 = vadd.f32 %v1182, %v1355
      %v1358 = vsub.f32 %v1315, %v1337
      %v1359 = vmul.f32 %v1343, %v1358
      %1361 = vrot.lane.b32.xlu0 %v1359, 32
      %v1362 = vpop.permute.xlu0 %1361
      %v1364 = vadd.f32 %v1190, %v1362
      %v1365 = vsel %vm663, %v1350, %v1364
      %1367 = vrot.lane.b32.xlu0 %v1357, 96
      %v1368 = vpop.permute.xlu0 %1367
      %v1370 = vsel %vm525, %v1365, %v1368
      %s1371 = scalar_lea.vmem %s324, %s1305
      %1372 = vst [vmem:[%s1371] sm:$0xff] %v1370
      %s1373 = smul.u32 %s673, 5
      %s1374 = sadd.s32 %s495, %s1373
      %s1375 = smul.u32 %s1374, 2
      %s1376 = smul.addr %s1375, 8
      %s1377 = scalar_lea.vmem [#allocation4], %s1376
      %v1378 = vld [vmem:[%s1377] sm:$0xff]
      %v1379 = vld [vmem:[%s1377 + $0x8] sm:$0xff]
      %v1380 = vld [vmem:[%s3] sm:$0xff]
      %v1381 = vld [vmem:[%s3 + $0x8] sm:$0xff]
      %v1382 = vld [vmem:[%s3 + $0x10] sm:$0xff]
      %v1383 = vld [vmem:[%s3 + $0x18] sm:$0xff]
      %v1384 = vld [vmem:[%s3 + $0x20] sm:$0xff]
      %v1385 = vld [vmem:[%s3 + $0x28] sm:$0xff]
      %v1386 = vld [vmem:[%s3 + $0x30] sm:$0xff]
      %v1387 = vld [vmem:[%s3 + $0x38] sm:$0xff]
      %v1388 = vld [vmem:[%s3 + $0x40] sm:$0xff]
      %v1389 = vld [vmem:[%s3 + $0x48] sm:$0xff]
      %v1390 = vld [vmem:[%s3 + $0x50] sm:$0xff]
      %v1391 = vld [vmem:[%s3 + $0x58] sm:$0xff]
      %v1392 = vld [vmem:[%s3 + $0x60] sm:$0xff]
      %v1393 = vld [vmem:[%s3 + $0x68] sm:$0xff]
      %v1394 = vld [vmem:[%s3 + $0x70] sm:$0xff]
      %v1395 = vld [vmem:[%s3 + $0x78] sm:$0xff]
      %v1396 = vld [vmem:[%s3 + $0x80] sm:$0xff]
      %v1397 = vld [vmem:[%s3 + $0x88] sm:$0xff]
      %v1398 = vld [vmem:[%s3 + $0x90] sm:$0xff]
      %v1399 = vld [vmem:[%s3 + $0x98] sm:$0xff]
      %v1400 = vld [vmem:[%s3 + $0xa0] sm:$0xff]
      %v1401 = vld [vmem:[%s3 + $0xa8] sm:$0xff]
      %v1402 = vld [vmem:[%s3 + $0xb0] sm:$0xff]
      %v1403 = vld [vmem:[%s3 + $0xb8] sm:$0xff]
      %v1405 = vsel %vm525, %v1365, 0
      %1407 = vmatprep.subr.mxu0 %v1381
      %1408 = vmatpush1.msra.mxu0 %v1380
      %1409 = vmatprep.subr.mxu0 %v1383
      %1410 = vmatpush1.msra.mxu0 %v1382
      %1411 = vmatprep.subr.mxu0 %v1385
      %1412 = vmatpush1.msra.mxu0 %v1384
      %1413 = vmatprep.subr.mxu0 %v1387
      %1414 = vmatpush1.msra.mxu0 %v1386
      %1415 = vmatprep.subr.mxu0 %v1389
      %1416 = vmatpush1.msra.mxu0 %v1388
      %1417 = vmatprep.subr.mxu0 %v1391
      %1418 = vmatpush1.msra.mxu0 %v1390
      %1419 = vmatprep.subr.mxu0 %v1393
      %1420 = vmatpush1.msra.mxu0 %v1392
      %1421 = vmatprep.subr.mxu0 %v1395
      %1422 = vmatpush1.msra.mxu0 %v1394
      %1423 = vmatprep.subr.mxu0 %v1397
      %1424 = vmatpush1.msra.mxu0 %v1396
      %1425 = vmatprep.subr.mxu0 %v1399
      %1426 = vmatpush1.msra.mxu0 %v1398
      %1427 = vmatprep.subr.mxu0 %v1401
      %1428 = vmatpush1.msra.mxu0 %v1400
      %1429 = vmatprep.subr.mxu0 %v1403
      %1430 = vmatpush1.msra.mxu0 %v1402
      %1431 = vmatprep.subr.mxu0 0.0
      %1432 = vmatpush1.msra.mxu0 0.0
      %1433 = vmatprep.subr.mxu0 0.0
      %1434 = vmatpush1.msra.mxu0 0.0
      %1435 = vmatprep.subr.mxu0 0.0
      %1436 = vmatpush1.msra.mxu0 0.0
      %1437 = vmatprep.subr.mxu0 0.0
      %1438 = vmatpush1.msra.mxu0 0.0
      %1439 = vmatprep.subr.mxu0 0.0
      %1440 = vmatpush1.msra.mxu0 0.0
      %1441 = vmatprep.subr.mxu0 0.0
      %1442 = vmatpush1.msra.mxu0 0.0
      %1443 = vmatprep.subr.mxu0 0.0
      %1444 = vmatpush1.msra.mxu0 0.0
      %1445 = vmatprep.subr.mxu0 0.0
      %1446 = vmatpush1.msra.mxu0 0.0
      %1447 = vmatprep.subr.mxu0 0.0
      %1448 = vmatpush1.msra.mxu0 0.0
      %1449 = vmatprep.subr.mxu0 0.0
      %1450 = vmatpush1.msra.mxu0 0.0
      %1451 = vmatprep.subr.mxu0 0.0
      %1452 = vmatpush1.msra.mxu0 0.0
      %1453 = vmatprep.subr.mxu0 0.0
      %1454 = vmatpush1.msra.mxu0 0.0
      %1455 = vmatprep.subr.mxu0 0.0
      %1456 = vmatpush1.msra.mxu0 0.0
      %1457 = vmatprep.subr.mxu0 0.0
      %1458 = vmatpush1.msra.mxu0 0.0
      %1459 = vmatprep.subr.mxu0 0.0
      %1460 = vmatpush1.msra.mxu0 0.0
      %1461 = vmatprep.subr.mxu0 0.0
      %1462 = vmatpush1.msra.mxu0 0.0
      %1463 = vmatprep.subr.mxu0 0.0
      %1464 = vmatpush1.msra.mxu0 0.0
      %1465 = vmatprep.subr.mxu0 0.0
      %1466 = vmatpush1.msra.mxu0 0.0
      %1467 = vmatprep.subr.mxu0 0.0
      %1468 = vmatpush1.msra.mxu0 0.0
      %1469 = vmatprep.subr.mxu0 0.0
      %1470 = vmatpush1.msra.mxu0 0.0
      %1471 = vmatprep.mubr.f32.mxu0 0.0
      %1472 = vmatmul.mubr.f32.gmra.mrb[0].mxu0 %v1405
      %v1473 = vpop.f32.mrb[0].mxu0
      %v1474 = vadd.f32 0.0, %v1473
      %v1475 = vpop.f32.mrb[0].mxu0
      %v1476 = vadd.f32 0.0, %v1475
      %1477 = vdwg.mxu0
      %v1478 = vadd.f32 %v1378, %v1474
      %v1479 = vadd.f32 %v1379, %v1476
      %s1480 = smul.u32 %s1374, 8
      %s1481 = scalar_lea.vmem %s308, %s1480
      %v1482 = vld [vmem:[%s1481] sm:$0xff]
      %v1483 = vxor.u32 %v1478, 2147483648
      %v1484 = vmul.f32 %v1483, 1.442695
      %v1485 = vpow.pop %v1484
      %v1486 = vadd.f32 %v1485, 1.0
      %v1487 = vrcp.pop %v1486
      %v1488 = vmul.f32 1.0, %v1487
      %v1489 = vtanh.pop %v1478
      %v1490 = vtanh.pop %v1479
      %1491 = vrot.lane.b32.xlu0 %v1357, 32
      %v1492 = vpop.permute.xlu0 %1491
      %v1494 = vmul.f32 %v1488, %v1492
      %1496 = vrot.lane.b32.xlu0 %v1489, 64
      %v1497 = vpop.permute.xlu0 %1496
      %v1499 = vmul.f32 %v1488, %v1497
      %1501 = vrot.lane.b32.xlu0 %v1499, 32
      %v1502 = vpop.permute.xlu0 %1501
      %v1504 = vadd.f32 %v1494, %v1502
      %v1505 = vtanh.pop %v1504
      %1507 = vrot.lane.b32.xlu0 %v1505, 64
      %v1508 = vpop.permute.xlu0 %1507
      %v1510 = vmul.f32 %v1488, %v1508
      %1511 = vrot.lane.b32.xlu0 %v1365, 96
      %v1512 = vpop.permute.xlu0 %1511
      %v1514 = vsub.f32 %v1510, %v1512
      %1516 = vset.pattern.permute.xlu0 0
      %1517 = vperm.xlu0 %1516, %v1482
      %v1518 = vpop.permute.xlu0 %1517
      %v1520 = vmul.f32 %v1518, %v1514
      %1522 = vrot.lane.b32.xlu0 %v1520, 32
      %v1523 = vpop.permute.xlu0 %1522
      %v1525 = vadd.f32 %v1365, %v1523
      %v1526 = vsub.f32 %v1504, %v1492
      %v1527 = vmul.f32 %v1518, %v1526
      %1529 = vrot.lane.b32.xlu0 %v1527, 96
      %v1530 = vpop.permute.xlu0 %1529
      %v1532 = vadd.f32 %v1357, %v1530
      %v1533 = vsub.f32 %v1490, %v1512
      %v1534 = vmul.f32 %v1518, %v1533
      %1536 = vrot.lane.b32.xlu0 %v1534, 32
      %v1537 = vpop.permute.xlu0 %1536
      %v1539 = vadd.f32 %v1365, %v1537
      %v1540 = vsel %vm663, %v1525, %v1539
      %1542 = vrot.lane.b32.xlu0 %v1532, 96
      %v1543 = vpop.permute.xlu0 %1542
      %v1545 = vsel %vm525, %v1540, %v1543
      %s1546 = scalar_lea.vmem %s324, %s1480
      %1547 = vst [vmem:[%s1546] sm:$0xff] %v1545
      %s1548 = smul.u32 %s673, 6
      %s1549 = sadd.s32 %s495, %s1548
      %s1550 = smul.u32 %s1549, 2
      %s1551 = smul.addr %s1550, 8
      %s1552 = scalar_lea.vmem [#allocation4], %s1551
      %v1553 = vld [vmem:[%s1552] sm:$0xff]
      %v1554 = vld [vmem:[%s1552 + $0x8] sm:$0xff]
      %v1555 = vld [vmem:[%s3] sm:$0xff]
      %v1556 = vld [vmem:[%s3 + $0x8] sm:$0xff]
      %v1557 = vld [vmem:[%s3 + $0x10] sm:$0xff]
      %v1558 = vld [vmem:[%s3 + $0x18] sm:$0xff]
      %v1559 = vld [vmem:[%s3 + $0x20] sm:$0xff]
      %v1560 = vld [vmem:[%s3 + $0x28] sm:$0xff]
      %v1561 = vld [vmem:[%s3 + $0x30] sm:$0xff]
      %v1562 = vld [vmem:[%s3 + $0x38] sm:$0xff]
      %v1563 = vld [vmem:[%s3 + $0x40] sm:$0xff]
      %v1564 = vld [vmem:[%s3 + $0x48] sm:$0xff]
      %v1565 = vld [vmem:[%s3 + $0x50] sm:$0xff]
      %v1566 = vld [vmem:[%s3 + $0x58] sm:$0xff]
      %v1567 = vld [vmem:[%s3 + $0x60] sm:$0xff]
      %v1568 = vld [vmem:[%s3 + $0x68] sm:$0xff]
      %v1569 = vld [vmem:[%s3 + $0x70] sm:$0xff]
      %v1570 = vld [vmem:[%s3 + $0x78] sm:$0xff]
      %v1571 = vld [vmem:[%s3 + $0x80] sm:$0xff]
      %v1572 = vld [vmem:[%s3 + $0x88] sm:$0xff]
      %v1573 = vld [vmem:[%s3 + $0x90] sm:$0xff]
      %v1574 = vld [vmem:[%s3 + $0x98] sm:$0xff]
      %v1575 = vld [vmem:[%s3 + $0xa0] sm:$0xff]
      %v1576 = vld [vmem:[%s3 + $0xa8] sm:$0xff]
      %v1577 = vld [vmem:[%s3 + $0xb0] sm:$0xff]
      %v1578 = vld [vmem:[%s3 + $0xb8] sm:$0xff]
      %v1580 = vsel %vm525, %v1540, 0
      %1582 = vmatprep.subr.mxu0 %v1556
      %1583 = vmatpush1.msra.mxu0 %v1555
      %1584 = vmatprep.subr.mxu0 %v1558
      %1585 = vmatpush1.msra.mxu0 %v1557
      %1586 = vmatprep.subr.mxu0 %v1560
      %1587 = vmatpush1.msra.mxu0 %v1559
      %1588 = vmatprep.subr.mxu0 %v1562
      %1589 = vmatpush1.msra.mxu0 %v1561
      %1590 = vmatprep.subr.mxu0 %v1564
      %1591 = vmatpush1.msra.mxu0 %v1563
      %1592 = vmatprep.subr.mxu0 %v1566
      %1593 = vmatpush1.msra.mxu0 %v1565
      %1594 = vmatprep.subr.mxu0 %v1568
      %1595 = vmatpush1.msra.mxu0 %v1567
      %1596 = vmatprep.subr.mxu0 %v1570
      %1597 = vmatpush1.msra.mxu0 %v1569
      %1598 = vmatprep.subr.mxu0 %v1572
      %1599 = vmatpush1.msra.mxu0 %v1571
      %1600 = vmatprep.subr.mxu0 %v1574
      %1601 = vmatpush1.msra.mxu0 %v1573
      %1602 = vmatprep.subr.mxu0 %v1576
      %1603 = vmatpush1.msra.mxu0 %v1575
      %1604 = vmatprep.subr.mxu0 %v1578
      %1605 = vmatpush1.msra.mxu0 %v1577
      %1606 = vmatprep.subr.mxu0 0.0
      %1607 = vmatpush1.msra.mxu0 0.0
      %1608 = vmatprep.subr.mxu0 0.0
      %1609 = vmatpush1.msra.mxu0 0.0
      %1610 = vmatprep.subr.mxu0 0.0
      %1611 = vmatpush1.msra.mxu0 0.0
      %1612 = vmatprep.subr.mxu0 0.0
      %1613 = vmatpush1.msra.mxu0 0.0
      %1614 = vmatprep.subr.mxu0 0.0
      %1615 = vmatpush1.msra.mxu0 0.0
      %1616 = vmatprep.subr.mxu0 0.0
      %1617 = vmatpush1.msra.mxu0 0.0
      %1618 = vmatprep.subr.mxu0 0.0
      %1619 = vmatpush1.msra.mxu0 0.0
      %1620 = vmatprep.subr.mxu0 0.0
      %1621 = vmatpush1.msra.mxu0 0.0
      %1622 = vmatprep.subr.mxu0 0.0
      %1623 = vmatpush1.msra.mxu0 0.0
      %1624 = vmatprep.subr.mxu0 0.0
      %1625 = vmatpush1.msra.mxu0 0.0
      %1626 = vmatprep.subr.mxu0 0.0
      %1627 = vmatpush1.msra.mxu0 0.0
      %1628 = vmatprep.subr.mxu0 0.0
      %1629 = vmatpush1.msra.mxu0 0.0
      %1630 = vmatprep.subr.mxu0 0.0
      %1631 = vmatpush1.msra.mxu0 0.0
      %1632 = vmatprep.subr.mxu0 0.0
      %1633 = vmatpush1.msra.mxu0 0.0
      %1634 = vmatprep.subr.mxu0 0.0
      %1635 = vmatpush1.msra.mxu0 0.0
      %1636 = vmatprep.subr.mxu0 0.0
      %1637 = vmatpush1.msra.mxu0 0.0
      %1638 = vmatprep.subr.mxu0 0.0
      %1639 = vmatpush1.msra.mxu0 0.0
      %1640 = vmatprep.subr.mxu0 0.0
      %1641 = vmatpush1.msra.mxu0 0.0
      %1642 = vmatprep.subr.mxu0 0.0
      %1643 = vmatpush1.msra.mxu0 0.0
      %1644 = vmatprep.subr.mxu0 0.0
      %1645 = vmatpush1.msra.mxu0 0.0
      %1646 = vmatprep.mubr.f32.mxu0 0.0
      %1647 = vmatmul.mubr.f32.gmra.mrb[0].mxu0 %v1580
      %v1648 = vpop.f32.mrb[0].mxu0
      %v1649 = vadd.f32 0.0, %v1648
      %v1650 = vpop.f32.mrb[0].mxu0
      %v1651 = vadd.f32 0.0, %v1650
      %1652 = vdwg.mxu0
      %v1653 = vadd.f32 %v1553, %v1649
      %v1654 = vadd.f32 %v1554, %v1651
      %s1655 = smul.u32 %s1549, 8
      %s1656 = scalar_lea.vmem %s308, %s1655
      %v1657 = vld [vmem:[%s1656] sm:$0xff]
      %v1658 = vxor.u32 %v1653, 2147483648
      %v1659 = vmul.f32 %v1658, 1.442695
      %v1660 = vpow.pop %v1659
      %v1661 = vadd.f32 %v1660, 1.0
      %v1662 = vrcp.pop %v1661
      %v1663 = vmul.f32 1.0, %v1662
      %v1664 = vtanh.pop %v1653
      %v1665 = vtanh.pop %v1654
      %1666 = vrot.lane.b32.xlu0 %v1532, 32
      %v1667 = vpop.permute.xlu0 %1666
      %v1669 = vmul.f32 %v1663, %v1667
      %1671 = vrot.lane.b32.xlu0 %v1664, 64
      %v1672 = vpop.permute.xlu0 %1671
      %v1674 = vmul.f32 %v1663, %v1672
      %1676 = vrot.lane.b32.xlu0 %v1674, 32
      %v1677 = vpop.permute.xlu0 %1676
      %v1679 = vadd.f32 %v1669, %v1677
      %v1680 = vtanh.pop %v1679
      %1682 = vrot.lane.b32.xlu0 %v1680, 64
      %v1683 = vpop.permute.xlu0 %1682
      %v1685 = vmul.f32 %v1663, %v1683
      %1686 = vrot.lane.b32.xlu0 %v1540, 96
      %v1687 = vpop.permute.xlu0 %1686
      %v1689 = vsub.f32 %v1685, %v1687
      %1691 = vset.pattern.permute.xlu0 0
      %1692 = vperm.xlu0 %1691, %v1657
      %v1693 = vpop.permute.xlu0 %1692
      %v1695 = vmul.f32 %v1693, %v1689
      %1697 = vrot.lane.b32.xlu0 %v1695, 32
      %v1698 = vpop.permute.xlu0 %1697
      %v1700 = vadd.f32 %v1540, %v1698
      %v1701 = vsub.f32 %v1679, %v1667
      %v1702 = vmul.f32 %v1693, %v1701
      %1704 = vrot.lane.b32.xlu0 %v1702, 96
      %v1705 = vpop.permute.xlu0 %1704
      %v1707 = vadd.f32 %v1532, %v1705
      %v1708 = vsub.f32 %v1665, %v1687
      %v1709 = vmul.f32 %v1693, %v1708
      %1711 = vrot.lane.b32.xlu0 %v1709, 32
      %v1712 = vpop.permute.xlu0 %1711
      %v1714 = vadd.f32 %v1540, %v1712
      %v1715 = vsel %vm663, %v1700, %v1714
      %1717 = vrot.lane.b32.xlu0 %v1707, 96
      %v1718 = vpop.permute.xlu0 %1717
      %v1720 = vsel %vm525, %v1715, %v1718
      %s1721 = scalar_lea.vmem %s324, %s1655
      %1722 = vst [vmem:[%s1721] sm:$0xff] %v1720
      %s1723 = smul.u32 %s673, 7
      %s1724 = sadd.s32 %s495, %s1723
      %s1725 = smul.u32 %s1724, 2
      %s1726 = smul.addr %s1725, 8
      %s1727 = scalar_lea.vmem [#allocation4], %s1726
      %v1728 = vld [vmem:[%s1727] sm:$0xff]
      %v1729 = vld [vmem:[%s1727 + $0x8] sm:$0xff]
      %v1730 = vld [vmem:[%s3] sm:$0xff]
      %v1731 = vld [vmem:[%s3 + $0x8] sm:$0xff]
      %v1732 = vld [vmem:[%s3 + $0x10] sm:$0xff]
      %v1733 = vld [vmem:[%s3 + $0x18] sm:$0xff]
      %v1734 = vld [vmem:[%s3 + $0x20] sm:$0xff]
      %v1735 = vld [vmem:[%s3 + $0x28] sm:$0xff]
      %v1736 = vld [vmem:[%s3 + $0x30] sm:$0xff]
      %v1737 = vld [vmem:[%s3 + $0x38] sm:$0xff]
      %v1738 = vld [vmem:[%s3 + $0x40] sm:$0xff]
      %v1739 = vld [vmem:[%s3 + $0x48] sm:$0xff]
      %v1740 = vld [vmem:[%s3 + $0x50] sm:$0xff]
      %v1741 = vld [vmem:[%s3 + $0x58] sm:$0xff]
      %v1742 = vld [vmem:[%s3 + $0x60] sm:$0xff]
      %v1743 = vld [vmem:[%s3 + $0x68] sm:$0xff]
      %v1744 = vld [vmem:[%s3 + $0x70] sm:$0xff]
      %v1745 = vld [vmem:[%s3 + $0x78] sm:$0xff]
      %v1746 = vld [vmem:[%s3 + $0x80] sm:$0xff]
      %v1747 = vld [vmem:[%s3 + $0x88] sm:$0xff]
      %v1748 = vld [vmem:[%s3 + $0x90] sm:$0xff]
      %v1749 = vld [vmem:[%s3 + $0x98] sm:$0xff]
      %v1750 = vld [vmem:[%s3 + $0xa0] sm:$0xff]
      %v1751 = vld [vmem:[%s3 + $0xa8] sm:$0xff]
      %v1752 = vld [vmem:[%s3 + $0xb0] sm:$0xff]
      %v1753 = vld [vmem:[%s3 + $0xb8] sm:$0xff]
      %v1755 = vsel %vm525, %v1715, 0
      %1757 = vmatprep.subr.mxu0 %v1731
      %1758 = vmatpush1.msra.mxu0 %v1730
      %1759 = vmatprep.subr.mxu0 %v1733
      %1760 = vmatpush1.msra.mxu0 %v1732
      %1761 = vmatprep.subr.mxu0 %v1735
      %1762 = vmatpush1.msra.mxu0 %v1734
      %1763 = vmatprep.subr.mxu0 %v1737
      %1764 = vmatpush1.msra.mxu0 %v1736
      %1765 = vmatprep.subr.mxu0 %v1739
      %1766 = vmatpush1.msra.mxu0 %v1738
      %1767 = vmatprep.subr.mxu0 %v1741
      %1768 = vmatpush1.msra.mxu0 %v1740
      %1769 = vmatprep.subr.mxu0 %v1743
      %1770 = vmatpush1.msra.mxu0 %v1742
      %1771 = vmatprep.subr.mxu0 %v1745
      %1772 = vmatpush1.msra.mxu0 %v1744
      %1773 = vmatprep.subr.mxu0 %v1747
      %1774 = vmatpush1.msra.mxu0 %v1746
      %1775 = vmatprep.subr.mxu0 %v1749
      %1776 = vmatpush1.msra.mxu0 %v1748
      %1777 = vmatprep.subr.mxu0 %v1751
      %1778 = vmatpush1.msra.mxu0 %v1750
      %1779 = vmatprep.subr.mxu0 %v1753
      %1780 = vmatpush1.msra.mxu0 %v1752
      %1781 = vmatprep.subr.mxu0 0.0
      %1782 = vmatpush1.msra.mxu0 0.0
      %1783 = vmatprep.subr.mxu0 0.0
      %1784 = vmatpush1.msra.mxu0 0.0
      %1785 = vmatprep.subr.mxu0 0.0
      %1786 = vmatpush1.msra.mxu0 0.0
      %1787 = vmatprep.subr.mxu0 0.0
      %1788 = vmatpush1.msra.mxu0 0.0
      %1789 = vmatprep.subr.mxu0 0.0
      %1790 = vmatpush1.msra.mxu0 0.0
      %1791 = vmatprep.subr.mxu0 0.0
      %1792 = vmatpush1.msra.mxu0 0.0
      %1793 = vmatprep.subr.mxu0 0.0
      %1794 = vmatpush1.msra.mxu0 0.0
      %1795 = vmatprep.subr.mxu0 0.0
      %1796 = vmatpush1.msra.mxu0 0.0
      %1797 = vmatprep.subr.mxu0 0.0
      %1798 = vmatpush1.msra.mxu0 0.0
      %1799 = vmatprep.subr.mxu0 0.0
      %1800 = vmatpush1.msra.mxu0 0.0
      %1801 = vmatprep.subr.mxu0 0.0
      %1802 = vmatpush1.msra.mxu0 0.0
      %1803 = vmatprep.subr.mxu0 0.0
      %1804 = vmatpush1.msra.mxu0 0.0
      %1805 = vmatprep.subr.mxu0 0.0
      %1806 = vmatpush1.msra.mxu0 0.0
      %1807 = vmatprep.subr.mxu0 0.0
      %1808 = vmatpush1.msra.mxu0 0.0
      %1809 = vmatprep.subr.mxu0 0.0
      %1810 = vmatpush1.msra.mxu0 0.0
      %1811 = vmatprep.subr.mxu0 0.0
      %1812 = vmatpush1.msra.mxu0 0.0
      %1813 = vmatprep.subr.mxu0 0.0
      %1814 = vmatpush1.msra.mxu0 0.0
      %1815 = vmatprep.subr.mxu0 0.0
      %1816 = vmatpush1.msra.mxu0 0.0
      %1817 = vmatprep.subr.mxu0 0.0
      %1818 = vmatpush1.msra.mxu0 0.0
      %1819 = vmatprep.subr.mxu0 0.0
      %1820 = vmatpush1.msra.mxu0 0.0
      %1821 = vmatprep.mubr.f32.mxu0 0.0
      %1822 = vmatmul.mubr.f32.gmra.mrb[0].mxu0 %v1755
      %v1823 = vpop.f32.mrb[0].mxu0
      %v1824 = vadd.f32 0.0, %v1823
      %v1825 = vpop.f32.mrb[0].mxu0
      %v1826 = vadd.f32 0.0, %v1825
      %1827 = vdwg.mxu0
      %v1828 = vadd.f32 %v1728, %v1824
      %v1829 = vadd.f32 %v1729, %v1826
      %s1830 = smul.u32 %s1724, 8
      %s1831 = scalar_lea.vmem %s308, %s1830
      %v1832 = vld [vmem:[%s1831] sm:$0xff]
      %v1833 = vxor.u32 %v1828, 2147483648
      %v1834 = vmul.f32 %v1833, 1.442695
      %v1835 = vpow.pop %v1834
      %v1836 = vadd.f32 %v1835, 1.0
      %v1837 = vrcp.pop %v1836
      %v1838 = vmul.f32 1.0, %v1837
      %v1839 = vtanh.pop %v1828
      %v1840 = vtanh.pop %v1829
      %1841 = vrot.lane.b32.xlu0 %v1707, 32
      %v1842 = vpop.permute.xlu0 %1841
      %v1844 = vmul.f32 %v1838, %v1842
      %1846 = vrot.lane.b32.xlu0 %v1839, 64
      %v1847 = vpop.permute.xlu0 %1846
      %v1849 = vmul.f32 %v1838, %v1847
      %1851 = vrot.lane.b32.xlu0 %v1849, 32
      %v1852 = vpop.permute.xlu0 %1851
      %v1854 = vadd.f32 %v1844, %v1852
      %v1855 = vtanh.pop %v1854
      %1857 = vrot.lane.b32.xlu0 %v1855, 64
      %v1858 = vpop.permute.xlu0 %1857
      %v1860 = vmul.f32 %v1838, %v1858
      %1861 = vrot.lane.b32.xlu0 %v1715, 96
      %v1862 = vpop.permute.xlu0 %1861
      %v1864 = vsub.f32 %v1860, %v1862
      %1866 = vset.pattern.permute.xlu0 0
      %1867 = vperm.xlu0 %1866, %v1832
      %v1868 = vpop.permute.xlu0 %1867
      %v1870 = vmul.f32 %v1868, %v1864
      %1872 = vrot.lane.b32.xlu0 %v1870, 32
      %v1873 = vpop.permute.xlu0 %1872
      %v1875 = vadd.f32 %v1715, %v1873
      %v1876 = vsub.f32 %v1854, %v1842
      %v1877 = vmul.f32 %v1868, %v1876
      %1879 = vrot.lane.b32.xlu0 %v1877, 96
      %v1880 = vpop.permute.xlu0 %1879
      %v1882 = vadd.f32 %v1707, %v1880
      %v1883 = vsub.f32 %v1840, %v1862
      %v1884 = vmul.f32 %v1868, %v1883
      %1886 = vrot.lane.b32.xlu0 %v1884, 32
      %v1887 = vpop.permute.xlu0 %1886
      %v1889 = vadd.f32 %v1715, %v1887
      %v1890 = vsel %vm663, %v1875, %v1889
      %1892 = vrot.lane.b32.xlu0 %v1882, 96
      %v1893 = vpop.permute.xlu0 %1892
      %v1895 = vsel %vm525, %v1890, %v1893
      %s1896 = scalar_lea.vmem %s324, %s1830
      %1897 = vst [vmem:[%s1896] sm:$0xff] %v1895
      %1898 = vst.msk [vmem:[#allocation2] sm:$0xff] %vm525, %v1890
      %1899 = vst.msk [vmem:[#allocation3] sm:$0xff] %vm663, %v1882
      %s1900 = smul.u32 %s20, 2
      %s1901 = ssub.s32 1, %s1900
      %s1902 = smul.u32 %s1901, %s21
      %s1903 = smul.u32 8, %s1902
      %p1904 = scmp.lt.s32.totalorder %s20, 1
      %s1905 = scalar_select %p1904, %s20, 1
      %p1906 = scmp.lt.s32.totalorder %s1903, 7
      %s1907 = scalar_select %p1906, %s1903, 7
      %s1908 = smul.addr %s1905, 8
      %s1909 = sadd.s32 %s1907, %s1908
      %s1910 = smul.addr %s1909, 8
      %s1911 = scalar_lea.vmem %s5, %s1910
      // Predicated region
      $region45: #{bislstm_forward.1} parent=39 // pred_check
        %p1912 = pneg %p181
      $region46: #{bislstm_forward.1} parent=39 // pred_check_branch
        %1914 = sbr.rel (%p1912) target = $region48
      $region47: #{bislstm_forward.1} parent=39 // pred_region
        %s1915 = smul.u32 %s20, 2
        %s1916 = ssub.s32 1, %s1915
        %s1917 = smul.u32 %s1916, %s21
        %s1918 = smul.u32 8, %s1917
      $region48: #{bislstm_forward.1} parent=39 // pred_fallthru
        _
    $region40: #{bislstm_forward.1} parent=5 // pred_fallthru
      _
    %p1919 = scmp.le.s32.totalorder 2, %s11
    // Predicated region
    $region49: #{bislstm_forward.1} parent=5 // pred_check
      %p1920 = pneg %p1919
    $region50: #{bislstm_forward.1} parent=5 // pred_check_branch
      %1922 = sbr.rel (%p1920) target = $region52
    $region51: #{bislstm_forward.1} parent=5 // pred_region
      %s1923 = ssub.s32 %s11, 2
      // Predicated region
      $region53: #{bislstm_forward.1} parent=51 // pred_check
        %p1924 = pneg %p187
      $region54: #{bislstm_forward.1} parent=51 // pred_check_branch
        %1926 = sbr.rel (%p1924) target = $region56
      $region55: #{bislstm_forward.1} parent=51 // pred_region
        %s1927 = smul.u32 %s22, 2
        %s1928 = ssub.s32 1, %s1927
        %s1929 = smul.u32 %s1928, %s23
        %s1930 = smul.u32 8, %s1929
        %p1931 = scmp.lt.s32.totalorder %s22, 1
        %s1932 = scalar_select %p1931, %s22, 1
        %p1933 = scmp.lt.s32.totalorder %s1930, 7
        %s1934 = scalar_select %p1933, %s1930, 7
        %s1935 = smul.addr %s1932, 8
        %s1936 = sadd.s32 %s1934, %s1935
        %s1937 = smul.addr %s1936, 8
        %s1938 = scalar_lea.vmem %s5, %s1937
      $region56: #{bislstm_forward.1} parent=51 // pred_fallthru
        _
    $region52: #{bislstm_forward.1} parent=5 // pred_fallthru
      _
  $region6: #{bislstm_forward.1} parent=0 // loop_footer
    %s15 = sadd.s32 1, %s11
  $region7: #{bislstm_forward.1} parent=0 // loop_footer_branch
    %10 = sbr.rel target = $region3
  $region8: #{bislstm_forward.1} parent=0 // loop_exit
    _

</llo_original>
